<compile_context>
chip_gen: v7x
topology: tpu7x:2x2x1
jax: 0.10.0
libtpu: 0.0.40
codegen_flags: <defaults>
</compile_context>

<pallas_src>
import numpy as np

import jax
import jax.numpy as jnp
from jax.experimental import pallas as pl
from jax.experimental.pallas import tpu as pltpu


# ---------------------------------------------------------------------------
# Fused Pallas kernel: conv1+BN+ReLU -> conv2+BN+ReLU -> deconv+BN+ReLU
# ---------------------------------------------------------------------------
def _edge_fused_kernel(
    p1_ref,                    # (M1, 9)     conv1 im2col patches (Cin=1)
    w1_ref,                    # (9, 64)     conv1 weights, rows = kh*3+kw
    b1_ref, g1_ref, be1_ref,   # (1, 64)     conv1 bias / BN gamma / BN beta
    s_ref,                     # (9*M2, M1)  0/1 gather matrix (conv2 im2col)
    w2_ref,                    # (9*64, 64)  conv2 weights, rows = tap*64+cin
    b2_ref, g2_ref, be2_ref,   # (1, 64)     conv2 bias / BN gamma / BN beta
    wd_ref,                    # (64, 4)     deconv weights, cols = kh*2+kw
    dvec_ref,                  # (1, 4)      [deconv bias, BN gamma, BN beta, 0]
    o_ref,                     # (M2, 4)     BN+ReLU'd deconv output
):
    eps = 1e-5

    # ---- encoder conv1: (M1,9)@(9,64) + bias, batch BN + ReLU ------------
    y1 = jnp.dot(p1_ref[...], w1_ref[...], preferred_element_type=jnp.float32)
    y1 = y1 + b1_ref[...]
    mu1 = jnp.mean(y1, axis=0, keepdims=True)
    var1 = jnp.mean((y1 - mu1) ** 2, axis=0, keepdims=True)       # biased var
    y1 = jnp.maximum(
        (y1 - mu1) * jax.lax.rsqrt(var1 + eps) * g1_ref[...] + be1_ref[...],
        0.0)

    # ---- encoder conv2: in-VMEM im2col via one selection matmul ----------
    # gathered[t*M2 + m, :] = conv1-output row at (2*io+kh-1, 2*jo+kw-1)
    # for tap t = kh*3+kw; all-zero rows of S encode the zero padding.
    gathered = jnp.dot(s_ref[...], y1, preferred_element_type=jnp.float32)
    M2 = o_ref.shape[0]
    C = w2_ref.shape[1]
    acc = None
    for t in range(9):  # unrolled: nine small (M2,64)@(64,64) MXU passes
        part = jnp.dot(gathered[t * M2:(t + 1) * M2, :],
                       w2_ref[t * C:(t + 1) * C, :],
                       preferred_element_type=jnp.float32)
        acc = part if acc is None else acc + part
    y2 = acc + b2_ref[...]
    mu2 = jnp.mean(y2, axis=0, keepdims=True)
    var2 = jnp.mean((y2 - mu2) ** 2, axis=0, keepdims=True)
    y2 = jnp.maximum(
        (y2 - mu2) * jax.lax.rsqrt(var2 + eps) * g2_ref[...] + be2_ref[...],
        0.0)

    # ---- decoder: ConvTranspose(k=2, s=2) as (M2,64)@(64,4) --------------
    bd = dvec_ref[0:1, 0:1]
    gd = dvec_ref[0:1, 1:2]
    bed = dvec_ref[0:1, 2:3]
    z = jnp.dot(y2, wd_ref[...], preferred_element_type=jnp.float32) + bd
    # BatchNorm2d(1): statistics over every element of the single channel.
    cnt = float(z.shape[0] * z.shape[1])
    muz = jnp.sum(jnp.sum(z, axis=1, keepdims=True),
                  axis=0, keepdims=True) / cnt
    dz = z - muz
    varz = jnp.sum(jnp.sum(dz * dz, axis=1, keepdims=True),
                   axis=0, keepdims=True) / cnt
    o_ref[...] = jnp.maximum(dz * jax.lax.rsqrt(varz + eps) * gd + bed, 0.0)


# ---------------------------------------------------------------------------
# Trace-time helpers (tiny layout glue; all heavy lifting is in the kernel)
# ---------------------------------------------------------------------------
def _im2col_s2(x_nhwc, k=3, stride=2, pad=1):
    """im2col for the Cin=1 first conv; produces a ~5 KB patch slab."""
    N, H, W, C = x_nhwc.shape
    xp = jnp.pad(x_nhwc, ((0, 0), (pad, pad), (pad, pad), (0, 0)))
    Ho = (H + 2 * pad - k) // stride + 1
    Wo = (W + 2 * pad - k) // stride + 1
    cols = []
    for kh in range(k):
        for kw in range(k):
            cols.append(
                xp[:, kh:kh + stride * Ho:stride, kw:kw + stride * Wo:stride, :])
    patches = jnp.stack(cols, axis=-2)            # (N, Ho, Wo, k*k, C)
    return patches.reshape(N, Ho, Wo, k * k * C), Ho, Wo


def _conv2_gather_matrix(N, H1, W1, H2, W2):
    """Constant 0/1 matrix S with S[t*M2 + m2, m1] = 1 iff conv1-output row m1
    feeds tap t (= kh*3+kw) of conv2-output row m2 (stride 2, pad 1, k=3).
    Out-of-bounds taps get all-zero rows, which exactly encodes zero padding."""
    M1, M2 = N * H1 * W1, N * H2 * W2
    S = np.zeros((9 * M2, M1), np.float32)
    for n in range(N):
        for io in range(H2):
            for jo in range(W2):
                m2 = (n * H2 + io) * W2 + jo
                for kh in range(3):
                    for kw in range(3):
                        ii = 2 * io + kh - 1
                        jj = 2 * jo + kw - 1
                        if 0 <= ii < H1 and 0 <= jj < W1:
                            m1 = (n * H1 + ii) * W1 + jj
                            S[(kh * 3 + kw) * M2 + m2, m1] = 1.0
    return S


# ---------------------------------------------------------------------------
# Module forward
# ---------------------------------------------------------------------------
def edge_reconstruct(x_nchw, p):
    N, Cin, H, W = x_nchw.shape
    assert Cin == 1
    C = 64
    x = jnp.transpose(x_nchw, (0, 2, 3, 1)).astype(jnp.float32)   # NHWC

    # conv1 im2col (Cin=1): trace-time layout glue feeding the fused kernel.
    patches1, H1, W1 = _im2col_s2(x, 3, 2, 1)
    M1 = N * H1 * W1
    p1 = patches1.reshape(M1, 9)

    H2 = (H1 - 1) // 2 + 1
    W2 = (W1 - 1) // 2 + 1
    M2 = N * H2 * W2
    S = jnp.asarray(_conv2_gather_matrix(N, H1, W1, H2, W2))      # constant

    # torch weight layouts -> matmul layouts used by the kernel.
    w1 = jnp.transpose(p["w1"], (2, 3, 1, 0)).reshape(9, C)       # (tap, cout)
    w2 = jnp.transpose(p["w2"], (2, 3, 1, 0)).reshape(9 * C, C)   # (tap*64+cin, cout)
    wd = jnp.transpose(p["wd"], (0, 2, 3, 1)).reshape(C, 4)       # (cin, kh*2+kw)
    b1, g1, be1 = (p["b1"].reshape(1, C), p["g1"].reshape(1, C),
                   p["be1"].reshape(1, C))
    b2, g2, be2 = (p["b2"].reshape(1, C), p["g2"].reshape(1, C),
                   p["be2"].reshape(1, C))
    dvec = jnp.concatenate(
        [p["bd"], p["gd"], p["bed"], jnp.zeros((1,), jnp.float32)]).reshape(1, 4)

    def full(shape):
        return pl.BlockSpec(shape, lambda i: (0, 0))

    z4 = pl.pallas_call(
        _edge_fused_kernel,
        out_shape=jax.ShapeDtypeStruct((M2, 4), jnp.float32),
        grid=(1,),
        in_specs=[
            full((M1, 9)),
            full((9, C)), full((1, C)), full((1, C)), full((1, C)),
            full((9 * M2, M1)),
            full((9 * C, C)), full((1, C)), full((1, C)), full((1, C)),
            full((C, 4)),
            full((1, 4)),
        ],
        out_specs=full((M2, 4)),
        compiler_params=pltpu.CompilerParams(
            dimension_semantics=("arbitrary",)),
    )(p1, w1, b1, g1, be1, S, w2, b2, g2, be2, wd, dvec)

    # Pixel-shuffle the (M2, 4) deconv result into NCHW (512 B of layout glue;
    # BN/ReLU already applied elementwise in-kernel so it commutes).
    z = z4.reshape(N, H2, W2, 2, 2)
    z = jnp.transpose(z, (0, 1, 3, 2, 4)).reshape(N, 2 * H2, 2 * W2)
    return z[:, None, :, :]                                       # (N,1,2H2,2W2)


# ---------------------------------------------------------------------------
# Deterministic parameter init (shapes from the module's __init__)
# ---------------------------------------------------------------------------
def init_params():
    k = jax.random.split(jax.random.PRNGKey(42), 6)
    return {
        # encoder conv1: Conv2d(1, 64, 3, stride=2, padding=1)
        "w1": 0.1 * jax.random.normal(k[0], (64, 1, 3, 3), jnp.float32),
        "b1": 0.01 * jax.random.normal(k[1], (64,), jnp.float32),
        "g1": jnp.ones((64,), jnp.float32),    # BatchNorm2d(64) affine defaults
        "be1": jnp.zeros((64,), jnp.float32),
        # encoder conv2: Conv2d(64, 64, 3, stride=2, padding=1)
        "w2": 0.05 * jax.random.normal(k[2], (64, 64, 3, 3), jnp.float32),
        "b2": 0.01 * jax.random.normal(k[3], (64,), jnp.float32),
        "g2": jnp.ones((64,), jnp.float32),
        "be2": jnp.zeros((64,), jnp.float32),
        # decoder: ConvTranspose2d(64, 1, 2, stride=2)
        "wd": 0.1 * jax.random.normal(k[4], (64, 1, 2, 2), jnp.float32),
        "bd": 0.01 * jax.random.normal(k[5], (1,), jnp.float32),
        "gd": jnp.ones((1,), jnp.float32),     # BatchNorm2d(1)
        "bed": jnp.zeros((1,), jnp.float32),
    }


if __name__ == "__main__":
    params = init_params()
    x = jax.random.normal(jax.random.PRNGKey(0), (2, 1, 16, 16), jnp.float32)

    out = jax.jit(edge_reconstruct)(x, params)
    out = jax.block_until_ready(out)

    # (2,1,16,16) -> conv s2 -> (2,64,8,8) -> conv s2 -> (2,64,4,4)
    #             -> deconv s2 -> (2,1,8,8)
    assert out.shape == (2, 1, 8, 8), out.shape
    assert bool(jnp.all(jnp.isfinite(out)))
    assert bool(jnp.all(out >= 0.0))  # final ReLU

    print("KERNEL_OK")
</pallas_src>

<mosaic_0001>
module attributes {stable_mosaic.version = 11 : i64} {
  func.func @_edge_fused_kernel(%arg0: i32, %arg1: memref<128x9xf32, #tpu.memory_space<vmem>>, %arg2: memref<9x64xf32, #tpu.memory_space<vmem>>, %arg3: memref<1x64xf32, #tpu.memory_space<vmem>>, %arg4: memref<1x64xf32, #tpu.memory_space<vmem>>, %arg5: memref<1x64xf32, #tpu.memory_space<vmem>>, %arg6: memref<288x128xf32, #tpu.memory_space<vmem>>, %arg7: memref<576x64xf32, #tpu.memory_space<vmem>>, %arg8: memref<1x64xf32, #tpu.memory_space<vmem>>, %arg9: memref<1x64xf32, #tpu.memory_space<vmem>>, %arg10: memref<1x64xf32, #tpu.memory_space<vmem>>, %arg11: memref<64x4xf32, #tpu.memory_space<vmem>>, %arg12: memref<1x4xf32, #tpu.memory_space<vmem>>, %arg13: memref<32x4xf32, #tpu.memory_space<vmem>>) attributes {dimension_semantics = [#tpu.dimension_semantics<arbitrary>], iteration_bounds = array<i64: 1>, scalar_prefetch = 0 : i64, scratch_operands = 0 : i64, tpu.core_type = #tpu.core_type<tc>, window_params = [{pipeline_mode = #tpu.pipeline_mode<synchronous>, transform_indices = @transform_0, window_bounds = array<i64: 128, 9>}, {pipeline_mode = #tpu.pipeline_mode<synchronous>, transform_indices = @transform_1, window_bounds = array<i64: 9, 64>}, {pipeline_mode = #tpu.pipeline_mode<synchronous>, transform_indices = @transform_2, window_bounds = array<i64: 1, 64>}, {pipeline_mode = #tpu.pipeline_mode<synchronous>, transform_indices = @transform_3, window_bounds = array<i64: 1, 64>}, {pipeline_mode = #tpu.pipeline_mode<synchronous>, transform_indices = @transform_4, window_bounds = array<i64: 1, 64>}, {pipeline_mode = #tpu.pipeline_mode<synchronous>, transform_indices = @transform_5, window_bounds = array<i64: 288, 128>}, {pipeline_mode = #tpu.pipeline_mode<synchronous>, transform_indices = @transform_6, window_bounds = array<i64: 576, 64>}, {pipeline_mode = #tpu.pipeline_mode<synchronous>, transform_indices = @transform_7, window_bounds = array<i64: 1, 64>}, {pipeline_mode = #tpu.pipeline_mode<synchronous>, transform_indices = @transform_8, window_bounds = array<i64: 1, 64>}, {pipeline_mode = #tpu.pipeline_mode<synchronous>, transform_indices = @transform_9, window_bounds = array<i64: 1, 64>}, {pipeline_mode = #tpu.pipeline_mode<synchronous>, transform_indices = @transform_10, window_bounds = array<i64: 64, 4>}, {pipeline_mode = #tpu.pipeline_mode<synchronous>, transform_indices = @transform_11, window_bounds = array<i64: 1, 4>}, {pipeline_mode = #tpu.pipeline_mode<synchronous>, transform_indices = @transform_12, window_bounds = array<i64: 32, 4>}]} {
    %c0 = arith.constant 0 : index
    %c0_0 = arith.constant 0 : index
    %0 = vector.load %arg1[%c0, %c0_0] : memref<128x9xf32, #tpu.memory_space<vmem>>, vector<128x9xf32>
    %c0_1 = arith.constant 0 : index
    %c0_2 = arith.constant 0 : index
    %1 = vector.load %arg2[%c0_1, %c0_2] : memref<9x64xf32, #tpu.memory_space<vmem>>, vector<9x64xf32>
    %cst = arith.constant dense<0.000000e+00> : vector<128x64xf32>
    %2 = tpu.matmul %0, %1, %cst {dimension_numbers = #tpu.dot_dimension_numbers<[1], [0], [0], [1], [0, 0, 1, 1], [], []>} : vector<128x9xf32>, vector<9x64xf32>, vector<128x64xf32> -> vector<128x64xf32>
    %c0_3 = arith.constant 0 : index
    %c0_4 = arith.constant 0 : index
    %3 = vector.load %arg3[%c0_3, %c0_4] : memref<1x64xf32, #tpu.memory_space<vmem>>, vector<1x64xf32>
    %4 = vector.broadcast %3 : vector<1x64xf32> to vector<128x64xf32>
    %5 = arith.addf %2, %4 : vector<128x64xf32>
    %cst_5 = arith.constant dense<0.000000e+00> : vector<64xf32>
    %6 = vector.multi_reduction <add>, %5, %cst_5 [0] : vector<128x64xf32> to vector<64xf32>
    %7 = vector.shape_cast %6 : vector<64xf32> to vector<1x64xf32>
    %cst_6 = arith.constant 1.280000e+02 : f32
    %8 = vector.broadcast %cst_6 : f32 to vector<1x64xf32>
    %9 = arith.divf %7, %8 : vector<1x64xf32>
    %10 = vector.broadcast %9 : vector<1x64xf32> to vector<128x64xf32>
    %11 = arith.subf %5, %10 : vector<128x64xf32>
    %12 = arith.mulf %11, %11 : vector<128x64xf32>
    %cst_7 = arith.constant dense<0.000000e+00> : vector<64xf32>
    %13 = vector.multi_reduction <add>, %12, %cst_7 [0] : vector<128x64xf32> to vector<64xf32>
    %14 = vector.shape_cast %13 : vector<64xf32> to vector<1x64xf32>
    %cst_8 = arith.constant 1.280000e+02 : f32
    %15 = vector.broadcast %cst_8 : f32 to vector<1x64xf32>
    %16 = arith.divf %14, %15 : vector<1x64xf32>
    %17 = vector.broadcast %9 : vector<1x64xf32> to vector<128x64xf32>
    %18 = arith.subf %5, %17 : vector<128x64xf32>
    %cst_9 = arith.constant 9.99999974E-6 : f32
    %19 = vector.broadcast %cst_9 : f32 to vector<1x64xf32>
    %20 = arith.addf %16, %19 : vector<1x64xf32>
    %21 = math.rsqrt %20 : vector<1x64xf32>
    %22 = vector.broadcast %21 : vector<1x64xf32> to vector<128x64xf32>
    %23 = arith.mulf %18, %22 : vector<128x64xf32>
    %c0_10 = arith.constant 0 : index
    %c0_11 = arith.constant 0 : index
    %24 = vector.load %arg4[%c0_10, %c0_11] : memref<1x64xf32, #tpu.memory_space<vmem>>, vector<1x64xf32>
    %25 = vector.broadcast %24 : vector<1x64xf32> to vector<128x64xf32>
    %26 = arith.mulf %23, %25 : vector<128x64xf32>
    %c0_12 = arith.constant 0 : index
    %c0_13 = arith.constant 0 : index
    %27 = vector.load %arg5[%c0_12, %c0_13] : memref<1x64xf32, #tpu.memory_space<vmem>>, vector<1x64xf32>
    %28 = vector.broadcast %27 : vector<1x64xf32> to vector<128x64xf32>
    %29 = arith.addf %26, %28 : vector<128x64xf32>
    %cst_14 = arith.constant 0.000000e+00 : f32
    %30 = vector.broadcast %cst_14 : f32 to vector<128x64xf32>
    %31 = arith.maximumf %29, %30 : vector<128x64xf32>
    %c0_15 = arith.constant 0 : index
    %c0_16 = arith.constant 0 : index
    %32 = vector.load %arg6[%c0_15, %c0_16] : memref<288x128xf32, #tpu.memory_space<vmem>>, vector<288x128xf32>
    %cst_17 = arith.constant dense<0.000000e+00> : vector<288x64xf32>
    %33 = tpu.matmul %32, %31, %cst_17 {dimension_numbers = #tpu.dot_dimension_numbers<[1], [0], [0], [1], [0, 0, 1, 1], [], []>} : vector<288x128xf32>, vector<128x64xf32>, vector<288x64xf32> -> vector<288x64xf32>
    %34 = vector.extract_strided_slice %33 {offsets = [0, 0], sizes = [32, 64], strides = [1, 1]} : vector<288x64xf32> to vector<32x64xf32>
    %c0_18 = arith.constant 0 : index
    %c0_19 = arith.constant 0 : index
    %35 = vector.load %arg7[%c0_18, %c0_19] : memref<576x64xf32, #tpu.memory_space<vmem>>, vector<64x64xf32>
    %cst_20 = arith.constant dense<0.000000e+00> : vector<32x64xf32>
    %36 = tpu.matmul %34, %35, %cst_20 {dimension_numbers = #tpu.dot_dimension_numbers<[1], [0], [0], [1], [0, 0, 1, 1], [], []>} : vector<32x64xf32>, vector<64x64xf32>, vector<32x64xf32> -> vector<32x64xf32>
    %37 = vector.extract_strided_slice %33 {offsets = [32, 0], sizes = [32, 64], strides = [1, 1]} : vector<288x64xf32> to vector<32x64xf32>
    %c64 = arith.constant 64 : index
    %c0_21 = arith.constant 0 : index
    %38 = vector.load %arg7[%c64, %c0_21] : memref<576x64xf32, #tpu.memory_space<vmem>>, vector<64x64xf32>
    %cst_22 = arith.constant dense<0.000000e+00> : vector<32x64xf32>
    %39 = tpu.matmul %37, %38, %cst_22 {dimension_numbers = #tpu.dot_dimension_numbers<[1], [0], [0], [1], [0, 0, 1, 1], [], []>} : vector<32x64xf32>, vector<64x64xf32>, vector<32x64xf32> -> vector<32x64xf32>
    %40 = arith.addf %36, %39 : vector<32x64xf32>
    %41 = vector.extract_strided_slice %33 {offsets = [64, 0], sizes = [32, 64], strides = [1, 1]} : vector<288x64xf32> to vector<32x64xf32>
    %c128 = arith.constant 128 : index
    %c0_23 = arith.constant 0 : index
    %42 = vector.load %arg7[%c128, %c0_23] : memref<576x64xf32, #tpu.memory_space<vmem>>, vector<64x64xf32>
    %cst_24 = arith.constant dense<0.000000e+00> : vector<32x64xf32>
    %43 = tpu.matmul %41, %42, %cst_24 {dimension_numbers = #tpu.dot_dimension_numbers<[1], [0], [0], [1], [0, 0, 1, 1], [], []>} : vector<32x64xf32>, vector<64x64xf32>, vector<32x64xf32> -> vector<32x64xf32>
    %44 = arith.addf %40, %43 : vector<32x64xf32>
    %45 = vector.extract_strided_slice %33 {offsets = [96, 0], sizes = [32, 64], strides = [1, 1]} : vector<288x64xf32> to vector<32x64xf32>
    %c192 = arith.constant 192 : index
    %c0_25 = arith.constant 0 : index
    %46 = vector.load %arg7[%c192, %c0_25] : memref<576x64xf32, #tpu.memory_space<vmem>>, vector<64x64xf32>
    %cst_26 = arith.constant dense<0.000000e+00> : vector<32x64xf32>
    %47 = tpu.matmul %45, %46, %cst_26 {dimension_numbers = #tpu.dot_dimension_numbers<[1], [0], [0], [1], [0, 0, 1, 1], [], []>} : vector<32x64xf32>, vector<64x64xf32>, vector<32x64xf32> -> vector<32x64xf32>
    %48 = arith.addf %44, %47 : vector<32x64xf32>
    %49 = vector.extract_strided_slice %33 {offsets = [128, 0], sizes = [32, 64], strides = [1, 1]} : vector<288x64xf32> to vector<32x64xf32>
    %c256 = arith.constant 256 : index
    %c0_27 = arith.constant 0 : index
    %50 = vector.load %arg7[%c256, %c0_27] : memref<576x64xf32, #tpu.memory_space<vmem>>, vector<64x64xf32>
    %cst_28 = arith.constant dense<0.000000e+00> : vector<32x64xf32>
    %51 = tpu.matmul %49, %50, %cst_28 {dimension_numbers = #tpu.dot_dimension_numbers<[1], [0], [0], [1], [0, 0, 1, 1], [], []>} : vector<32x64xf32>, vector<64x64xf32>, vector<32x64xf32> -> vector<32x64xf32>
    %52 = arith.addf %48, %51 : vector<32x64xf32>
    %53 = vector.extract_strided_slice %33 {offsets = [160, 0], sizes = [32, 64], strides = [1, 1]} : vector<288x64xf32> to vector<32x64xf32>
    %c320 = arith.constant 320 : index
    %c0_29 = arith.constant 0 : index
    %54 = vector.load %arg7[%c320, %c0_29] : memref<576x64xf32, #tpu.memory_space<vmem>>, vector<64x64xf32>
    %cst_30 = arith.constant dense<0.000000e+00> : vector<32x64xf32>
    %55 = tpu.matmul %53, %54, %cst_30 {dimension_numbers = #tpu.dot_dimension_numbers<[1], [0], [0], [1], [0, 0, 1, 1], [], []>} : vector<32x64xf32>, vector<64x64xf32>, vector<32x64xf32> -> vector<32x64xf32>
    %56 = arith.addf %52, %55 : vector<32x64xf32>
    %57 = vector.extract_strided_slice %33 {offsets = [192, 0], sizes = [32, 64], strides = [1, 1]} : vector<288x64xf32> to vector<32x64xf32>
    %c384 = arith.constant 384 : index
    %c0_31 = arith.constant 0 : index
    %58 = vector.load %arg7[%c384, %c0_31] : memref<576x64xf32, #tpu.memory_space<vmem>>, vector<64x64xf32>
    %cst_32 = arith.constant dense<0.000000e+00> : vector<32x64xf32>
    %59 = tpu.matmul %57, %58, %cst_32 {dimension_numbers = #tpu.dot_dimension_numbers<[1], [0], [0], [1], [0, 0, 1, 1], [], []>} : vector<32x64xf32>, vector<64x64xf32>, vector<32x64xf32> -> vector<32x64xf32>
    %60 = arith.addf %56, %59 : vector<32x64xf32>
    %61 = vector.extract_strided_slice %33 {offsets = [224, 0], sizes = [32, 64], strides = [1, 1]} : vector<288x64xf32> to vector<32x64xf32>
    %c448 = arith.constant 448 : index
    %c0_33 = arith.constant 0 : index
    %62 = vector.load %arg7[%c448, %c0_33] : memref<576x64xf32, #tpu.memory_space<vmem>>, vector<64x64xf32>
    %cst_34 = arith.constant dense<0.000000e+00> : vector<32x64xf32>
    %63 = tpu.matmul %61, %62, %cst_34 {dimension_numbers = #tpu.dot_dimension_numbers<[1], [0], [0], [1], [0, 0, 1, 1], [], []>} : vector<32x64xf32>, vector<64x64xf32>, vector<32x64xf32> -> vector<32x64xf32>
    %64 = arith.addf %60, %63 : vector<32x64xf32>
    %65 = vector.extract_strided_slice %33 {offsets = [256, 0], sizes = [32, 64], strides = [1, 1]} : vector<288x64xf32> to vector<32x64xf32>
    %c512 = arith.constant 512 : index
    %c0_35 = arith.constant 0 : index
    %66 = vector.load %arg7[%c512, %c0_35] : memref<576x64xf32, #tpu.memory_space<vmem>>, vector<64x64xf32>
    %cst_36 = arith.constant dense<0.000000e+00> : vector<32x64xf32>
    %67 = tpu.matmul %65, %66, %cst_36 {dimension_numbers = #tpu.dot_dimension_numbers<[1], [0], [0], [1], [0, 0, 1, 1], [], []>} : vector<32x64xf32>, vector<64x64xf32>, vector<32x64xf32> -> vector<32x64xf32>
    %68 = arith.addf %64, %67 : vector<32x64xf32>
    %c0_37 = arith.constant 0 : index
    %c0_38 = arith.constant 0 : index
    %69 = vector.load %arg8[%c0_37, %c0_38] : memref<1x64xf32, #tpu.memory_space<vmem>>, vector<1x64xf32>
    %70 = vector.broadcast %69 : vector<1x64xf32> to vector<32x64xf32>
    %71 = arith.addf %68, %70 : vector<32x64xf32>
    %cst_39 = arith.constant dense<0.000000e+00> : vector<64xf32>
    %72 = vector.multi_reduction <add>, %71, %cst_39 [0] : vector<32x64xf32> to vector<64xf32>
    %73 = vector.shape_cast %72 : vector<64xf32> to vector<1x64xf32>
    %cst_40 = arith.constant 3.200000e+01 : f32
    %74 = vector.broadcast %cst_40 : f32 to vector<1x64xf32>
    %75 = arith.divf %73, %74 : vector<1x64xf32>
    %76 = vector.broadcast %75 : vector<1x64xf32> to vector<32x64xf32>
    %77 = arith.subf %71, %76 : vector<32x64xf32>
    %78 = arith.mulf %77, %77 : vector<32x64xf32>
    %cst_41 = arith.constant dense<0.000000e+00> : vector<64xf32>
    %79 = vector.multi_reduction <add>, %78, %cst_41 [0] : vector<32x64xf32> to vector<64xf32>
    %80 = vector.shape_cast %79 : vector<64xf32> to vector<1x64xf32>
    %cst_42 = arith.constant 3.200000e+01 : f32
    %81 = vector.broadcast %cst_42 : f32 to vector<1x64xf32>
    %82 = arith.divf %80, %81 : vector<1x64xf32>
    %83 = vector.broadcast %75 : vector<1x64xf32> to vector<32x64xf32>
    %84 = arith.subf %71, %83 : vector<32x64xf32>
    %cst_43 = arith.constant 9.99999974E-6 : f32
    %85 = vector.broadcast %cst_43 : f32 to vector<1x64xf32>
    %86 = arith.addf %82, %85 : vector<1x64xf32>
    %87 = math.rsqrt %86 : vector<1x64xf32>
    %88 = vector.broadcast %87 : vector<1x64xf32> to vector<32x64xf32>
    %89 = arith.mulf %84, %88 : vector<32x64xf32>
    %c0_44 = arith.constant 0 : index
    %c0_45 = arith.constant 0 : index
    %90 = vector.load %arg9[%c0_44, %c0_45] : memref<1x64xf32, #tpu.memory_space<vmem>>, vector<1x64xf32>
    %91 = vector.broadcast %90 : vector<1x64xf32> to vector<32x64xf32>
    %92 = arith.mulf %89, %91 : vector<32x64xf32>
    %c0_46 = arith.constant 0 : index
    %c0_47 = arith.constant 0 : index
    %93 = vector.load %arg10[%c0_46, %c0_47] : memref<1x64xf32, #tpu.memory_space<vmem>>, vector<1x64xf32>
    %94 = vector.broadcast %93 : vector<1x64xf32> to vector<32x64xf32>
    %95 = arith.addf %92, %94 : vector<32x64xf32>
    %cst_48 = arith.constant 0.000000e+00 : f32
    %96 = vector.broadcast %cst_48 : f32 to vector<32x64xf32>
    %97 = arith.maximumf %95, %96 : vector<32x64xf32>
    %c0_49 = arith.constant 0 : index
    %c0_50 = arith.constant 0 : index
    %98 = vector.load %arg12[%c0_49, %c0_50] : memref<1x4xf32, #tpu.memory_space<vmem>>, vector<1x1xf32>
    %c0_51 = arith.constant 0 : index
    %c1 = arith.constant 1 : index
    %99 = vector.load %arg12[%c0_51, %c1] : memref<1x4xf32, #tpu.memory_space<vmem>>, vector<1x1xf32>
    %c0_52 = arith.constant 0 : index
    %c2 = arith.constant 2 : index
    %100 = vector.load %arg12[%c0_52, %c2] : memref<1x4xf32, #tpu.memory_space<vmem>>, vector<1x1xf32>
    %c0_53 = arith.constant 0 : index
    %c0_54 = arith.constant 0 : index
    %101 = vector.load %arg11[%c0_53, %c0_54] : memref<64x4xf32, #tpu.memory_space<vmem>>, vector<64x4xf32>
    %cst_55 = arith.constant dense<0.000000e+00> : vector<32x4xf32>
    %102 = tpu.matmul %97, %101, %cst_55 {dimension_numbers = #tpu.dot_dimension_numbers<[1], [0], [0], [1], [0, 0, 1, 1], [], []>} : vector<32x64xf32>, vector<64x4xf32>, vector<32x4xf32> -> vector<32x4xf32>
    %103 = vector.broadcast %98 : vector<1x1xf32> to vector<32x4xf32>
    %104 = arith.addf %102, %103 : vector<32x4xf32>
    %cst_56 = arith.constant dense<0.000000e+00> : vector<32xf32>
    %105 = vector.multi_reduction <add>, %104, %cst_56 [1] : vector<32x4xf32> to vector<32xf32>
    %106 = vector.shape_cast %105 : vector<32xf32> to vector<32x1xf32>
    %cst_57 = arith.constant dense<0.000000e+00> : vector<1xf32>
    %107 = vector.multi_reduction <add>, %106, %cst_57 [0] : vector<32x1xf32> to vector<1xf32>
    %108 = vector.shape_cast %107 : vector<1xf32> to vector<1x1xf32>
    %cst_58 = arith.constant 1.280000e+02 : f32
    %109 = vector.broadcast %cst_58 : f32 to vector<1x1xf32>
    %110 = arith.divf %108, %109 : vector<1x1xf32>
    %111 = vector.broadcast %110 : vector<1x1xf32> to vector<32x4xf32>
    %112 = arith.subf %104, %111 : vector<32x4xf32>
    %113 = arith.mulf %112, %112 : vector<32x4xf32>
    %cst_59 = arith.constant dense<0.000000e+00> : vector<32xf32>
    %114 = vector.multi_reduction <add>, %113, %cst_59 [1] : vector<32x4xf32> to vector<32xf32>
    %115 = vector.shape_cast %114 : vector<32xf32> to vector<32x1xf32>
    %cst_60 = arith.constant dense<0.000000e+00> : vector<1xf32>
    %116 = vector.multi_reduction <add>, %115, %cst_60 [0] : vector<32x1xf32> to vector<1xf32>
    %117 = vector.shape_cast %116 : vector<1xf32> to vector<1x1xf32>
    %cst_61 = arith.constant 1.280000e+02 : f32
    %118 = vector.broadcast %cst_61 : f32 to vector<1x1xf32>
    %119 = arith.divf %117, %118 : vector<1x1xf32>
    %cst_62 = arith.constant 9.99999974E-6 : f32
    %120 = vector.broadcast %cst_62 : f32 to vector<1x1xf32>
    %121 = arith.addf %119, %120 : vector<1x1xf32>
    %122 = math.rsqrt %121 : vector<1x1xf32>
    %123 = vector.broadcast %122 : vector<1x1xf32> to vector<32x4xf32>
    %124 = arith.mulf %112, %123 : vector<32x4xf32>
    %125 = vector.broadcast %99 : vector<1x1xf32> to vector<32x4xf32>
    %126 = arith.mulf %124, %125 : vector<32x4xf32>
    %127 = vector.broadcast %100 : vector<1x1xf32> to vector<32x4xf32>
    %128 = arith.addf %126, %127 : vector<32x4xf32>
    %cst_63 = arith.constant 0.000000e+00 : f32
    %129 = vector.broadcast %cst_63 : f32 to vector<32x4xf32>
    %130 = arith.maximumf %128, %129 : vector<32x4xf32>
    %c0_64 = arith.constant 0 : index
    %c0_65 = arith.constant 0 : index
    %131 = vector.load %arg13[%c0_64, %c0_65] : memref<32x4xf32, #tpu.memory_space<vmem>>, vector<32x4xf32>
    tpu.vector_store %arg13[%c0_64, %c0_65], %130 {strides = array<i32>} : memref<32x4xf32, #tpu.memory_space<vmem>>, vector<32x4xf32>,
    return
  }
  func.func @transform_0(%arg0: i32) -> (i32, i32) {
    %c0_i32 = arith.constant 0 : i32
    %c0_i32_0 = arith.constant 0 : i32
    %c0_i32_1 = arith.constant 0 : i32
    return %c0_i32, %c0_i32_0 : i32, i32
  }
  func.func @transform_1(%arg0: i32) -> (i32, i32) {
    %c0_i32 = arith.constant 0 : i32
    %c0_i32_0 = arith.constant 0 : i32
    %c0_i32_1 = arith.constant 0 : i32
    return %c0_i32, %c0_i32_0 : i32, i32
  }
  func.func @transform_2(%arg0: i32) -> (i32, i32) {
    %c0_i32 = arith.constant 0 : i32
    %c0_i32_0 = arith.constant 0 : i32
    %c0_i32_1 = arith.constant 0 : i32
    return %c0_i32, %c0_i32_0 : i32, i32
  }
  func.func @transform_3(%arg0: i32) -> (i32, i32) {
    %c0_i32 = arith.constant 0 : i32
    %c0_i32_0 = arith.constant 0 : i32
    %c0_i32_1 = arith.constant 0 : i32
    return %c0_i32, %c0_i32_0 : i32, i32
  }
  func.func @transform_4(%arg0: i32) -> (i32, i32) {
    %c0_i32 = arith.constant 0 : i32
    %c0_i32_0 = arith.constant 0 : i32
    %c0_i32_1 = arith.constant 0 : i32
    return %c0_i32, %c0_i32_0 : i32, i32
  }
  func.func @transform_5(%arg0: i32) -> (i32, i32) {
    %c0_i32 = arith.constant 0 : i32
    %c0_i32_0 = arith.constant 0 : i32
    %c0_i32_1 = arith.constant 0 : i32
    return %c0_i32, %c0_i32_0 : i32, i32
  }
  func.func @transform_6(%arg0: i32) -> (i32, i32) {
    %c0_i32 = arith.constant 0 : i32
    %c0_i32_0 = arith.constant 0 : i32
    %c0_i32_1 = arith.constant 0 : i32
    return %c0_i32, %c0_i32_0 : i32, i32
  }
  func.func @transform_7(%arg0: i32) -> (i32, i32) {
    %c0_i32 = arith.constant 0 : i32
    %c0_i32_0 = arith.constant 0 : i32
    %c0_i32_1 = arith.constant 0 : i32
    return %c0_i32, %c0_i32_0 : i32, i32
  }
  func.func @transform_8(%arg0: i32) -> (i32, i32) {
    %c0_i32 = arith.constant 0 : i32
    %c0_i32_0 = arith.constant 0 : i32
    %c0_i32_1 = arith.constant 0 : i32
    return %c0_i32, %c0_i32_0 : i32, i32
  }
  func.func @transform_9(%arg0: i32) -> (i32, i32) {
    %c0_i32 = arith.constant 0 : i32
    %c0_i32_0 = arith.constant 0 : i32
    %c0_i32_1 = arith.constant 0 : i32
    return %c0_i32, %c0_i32_0 : i32, i32
  }
  func.func @transform_10(%arg0: i32) -> (i32, i32) {
    %c0_i32 = arith.constant 0 : i32
    %c0_i32_0 = arith.constant 0 : i32
    %c0_i32_1 = arith.constant 0 : i32
    return %c0_i32, %c0_i32_0 : i32, i32
  }
  func.func @transform_11(%arg0: i32) -> (i32, i32) {
    %c0_i32 = arith.constant 0 : i32
    %c0_i32_0 = arith.constant 0 : i32
    %c0_i32_1 = arith.constant 0 : i32
    return %c0_i32, %c0_i32_0 : i32, i32
  }
  func.func @transform_12(%arg0: i32) -> (i32, i32) {
    %c0_i32 = arith.constant 0 : i32
    %c0_i32_0 = arith.constant 0 : i32
    %c0_i32_1 = arith.constant 0 : i32
    return %c0_i32, %c0_i32_0 : i32, i32
  }
}

</mosaic_0001>

<llo_original>
// kernel: edge_reconstruct.1
$region0: #{edge_reconstruct.1}
  #allocation0 [shape = 'u32[]', space=smem, size = 0x4, offset = 0x4, fixed_abs, tag = 'smem constant byte address 0x4 - core index']
  #allocation1 [shape = 'u32[144,128]{1,0:T(1,128)}', space=vmem, size = 0x12000, scoped, tag = 'internal scratch']
  %s0 = inlined_call_operand.vmem [shape: f32[128,9], index: 0, kind: input, shape index: {}]
  %s1 = inlined_call_operand.vmem [shape: f32[9,64], index: 1, kind: input, shape index: {}]
  %s2 = inlined_call_operand.vmem [shape: f32[1,64], index: 2, kind: input, shape index: {}]
  %s3 = inlined_call_operand.vmem [shape: f32[1,64], index: 3, kind: input, shape index: {}]
  %s4 = inlined_call_operand.vmem [shape: f32[1,64], index: 4, kind: input, shape index: {}]
  %s5 = inlined_call_operand.vmem [shape: f32[288,128], index: 5, kind: input, shape index: {}]
  %s6 = inlined_call_operand.vmem [shape: f32[576,64], index: 6, kind: input, shape index: {}]
  %s7 = inlined_call_operand.vmem [shape: f32[1,64], index: 7, kind: input, shape index: {}]
  %s8 = inlined_call_operand.vmem [shape: f32[1,64], index: 8, kind: input, shape index: {}]
  %s9 = inlined_call_operand.vmem [shape: f32[1,64], index: 9, kind: input, shape index: {}]
  %s10 = inlined_call_operand.vmem [shape: f32[64,4], index: 10, kind: input, shape index: {}]
  %s11 = inlined_call_operand.vmem [shape: f32[1,4], index: 11, kind: input, shape index: {}]
  %s12 = inlined_call_operand.vmem [shape: f32[32,4], index: 12, kind: output, shape index: {}]
  %s13 = sld [smem:[#allocation0]]
  $region58: #{edge_reconstruct.1} parent=0
    _
  %s15 = ssub.s32 1, %s13
  %s16 = scalar_select 0, %s15, %s13
  // Predicated region
  $region2: #{edge_reconstruct.1} parent=0 // pred_check
    _
  $region3: #{edge_reconstruct.1} parent=0 // pred_check_branch
    %18 = sbr.rel (0) target = $region5
  $region4: #{edge_reconstruct.1} parent=0 // pred_region
    _
  $region5: #{edge_reconstruct.1} parent=0 // pred_fallthru
    _
  // Predicated region
  $region6: #{edge_reconstruct.1} parent=0 // pred_check
    _
  $region7: #{edge_reconstruct.1} parent=0 // pred_check_branch
    %20 = sbr.rel (0) target = $region9
  $region8: #{edge_reconstruct.1} parent=0 // pred_region
    _
  $region9: #{edge_reconstruct.1} parent=0 // pred_fallthru
    _
  // Predicated region
  $region10: #{edge_reconstruct.1} parent=0 // pred_check
    _
  $region11: #{edge_reconstruct.1} parent=0 // pred_check_branch
    %22 = sbr.rel (0) target = $region13
  $region12: #{edge_reconstruct.1} parent=0 // pred_region
    _
  $region13: #{edge_reconstruct.1} parent=0 // pred_fallthru
    _
  // Predicated region
  $region14: #{edge_reconstruct.1} parent=0 // pred_check
    _
  $region15: #{edge_reconstruct.1} parent=0 // pred_check_branch
    %24 = sbr.rel (0) target = $region17
  $region16: #{edge_reconstruct.1} parent=0 // pred_region
    _
  $region17: #{edge_reconstruct.1} parent=0 // pred_fallthru
    _
  // Predicated region
  $region18: #{edge_reconstruct.1} parent=0 // pred_check
    _
  $region19: #{edge_reconstruct.1} parent=0 // pred_check_branch
    %26 = sbr.rel (0) target = $region21
  $region20: #{edge_reconstruct.1} parent=0 // pred_region
    _
  $region21: #{edge_reconstruct.1} parent=0 // pred_fallthru
    _
  // Predicated region
  $region22: #{edge_reconstruct.1} parent=0 // pred_check
    _
  $region23: #{edge_reconstruct.1} parent=0 // pred_check_branch
    %28 = sbr.rel (0) target = $region25
  $region24: #{edge_reconstruct.1} parent=0 // pred_region
    _
  $region25: #{edge_reconstruct.1} parent=0 // pred_fallthru
    _
  // Predicated region
  $region26: #{edge_reconstruct.1} parent=0 // pred_check
    _
  $region27: #{edge_reconstruct.1} parent=0 // pred_check_branch
    %30 = sbr.rel (0) target = $region29
  $region28: #{edge_reconstruct.1} parent=0 // pred_region
    _
  $region29: #{edge_reconstruct.1} parent=0 // pred_fallthru
    _
  // Predicated region
  $region30: #{edge_reconstruct.1} parent=0 // pred_check
    _
  $region31: #{edge_reconstruct.1} parent=0 // pred_check_branch
    %32 = sbr.rel (0) target = $region33
  $region32: #{edge_reconstruct.1} parent=0 // pred_region
    _
  $region33: #{edge_reconstruct.1} parent=0 // pred_fallthru
    _
  // Predicated region
  $region34: #{edge_reconstruct.1} parent=0 // pred_check
    _
  $region35: #{edge_reconstruct.1} parent=0 // pred_check_branch
    %34 = sbr.rel (0) target = $region37
  $region36: #{edge_reconstruct.1} parent=0 // pred_region
    _
  $region37: #{edge_reconstruct.1} parent=0 // pred_fallthru
    _
  // Predicated region
  $region38: #{edge_reconstruct.1} parent=0 // pred_check
    _
  $region39: #{edge_reconstruct.1} parent=0 // pred_check_branch
    %36 = sbr.rel (0) target = $region41
  $region40: #{edge_reconstruct.1} parent=0 // pred_region
    _
  $region41: #{edge_reconstruct.1} parent=0 // pred_fallthru
    _
  // Predicated region
  $region42: #{edge_reconstruct.1} parent=0 // pred_check
    _
  $region43: #{edge_reconstruct.1} parent=0 // pred_check_branch
    %38 = sbr.rel (0) target = $region45
  $region44: #{edge_reconstruct.1} parent=0 // pred_region
    _
  $region45: #{edge_reconstruct.1} parent=0 // pred_fallthru
    _
  // Predicated region
  $region46: #{edge_reconstruct.1} parent=0 // pred_check
    _
  $region47: #{edge_reconstruct.1} parent=0 // pred_check_branch
    %40 = sbr.rel (0) target = $region49
  $region48: #{edge_reconstruct.1} parent=0 // pred_region
    _
  $region49: #{edge_reconstruct.1} parent=0 // pred_fallthru
    _
  %v41 = vld [vmem:[%s0] sm:$0xff]
  %v42 = vld [vmem:[%s0 + $0x8] sm:$0xff]
  %v43 = vld [vmem:[%s0 + $0x10] sm:$0xff]
  %v44 = vld [vmem:[%s0 + $0x18] sm:$0xff]
  %v45 = vld [vmem:[%s0 + $0x20] sm:$0xff]
  %v46 = vld [vmem:[%s0 + $0x28] sm:$0xff]
  %v47 = vld [vmem:[%s0 + $0x30] sm:$0xff]
  %v48 = vld [vmem:[%s0 + $0x38] sm:$0xff]
  %v49 = vld [vmem:[%s0 + $0x40] sm:$0xff]
  %v50 = vld [vmem:[%s0 + $0x48] sm:$0xff]
  %v51 = vld [vmem:[%s0 + $0x50] sm:$0xff]
  %v52 = vld [vmem:[%s0 + $0x58] sm:$0xff]
  %v53 = vld [vmem:[%s0 + $0x60] sm:$0xff]
  %v54 = vld [vmem:[%s0 + $0x68] sm:$0xff]
  %v55 = vld [vmem:[%s0 + $0x70] sm:$0xff]
  %v56 = vld [vmem:[%s0 + $0x78] sm:$0xff]
  %v57 = vld [vmem:[%s1] sm:$0xff]
  %v58 = vld [vmem:[%s1 + $0x8] sm:$0x1]
  %v59 = vld [vmem:[%s2] sm:$0x1]
  %v61 = vlaneseq
  %v62 = vshrl.u32 %v61, 7
  %v63 = vsub.s32 0, %v62
  %v64 = vrot.slane %v59, %v63
  %vm66 = vcmask 72704
  %v68 = vsel %vm66, %v41, 0
  %v71 = vsel %vm66, %v42, 0
  %v74 = vsel %vm66, %v43, 0
  %v77 = vsel %vm66, %v44, 0
  %v80 = vsel %vm66, %v45, 0
  %v83 = vsel %vm66, %v46, 0
  %v86 = vsel %vm66, %v47, 0
  %v89 = vsel %vm66, %v48, 0
  %v92 = vsel %vm66, %v49, 0
  %v95 = vsel %vm66, %v50, 0
  %v98 = vsel %vm66, %v51, 0
  %v101 = vsel %vm66, %v52, 0
  %v104 = vsel %vm66, %v53, 0
  %v107 = vsel %vm66, %v54, 0
  %v110 = vsel %vm66, %v55, 0
  %v113 = vsel %vm66, %v56, 0
  %vm115 = vcmask 1040384
  %v117 = vsel %vm115, %v58, 0
  %119 = vmatprep.subr.mxu0 0.0
  %120 = vmatpush1.msra.mxu0 %v57
  %121 = vmatprep.subr.mxu0 0.0
  %122 = vmatpush1.msra.mxu0 %v117
  %123 = vmatprep.subr.mxu0 0.0
  %124 = vmatpush1.msra.mxu0 0.0
  %125 = vmatprep.subr.mxu0 0.0
  %126 = vmatpush1.msra.mxu0 0.0
  %127 = vmatprep.subr.mxu0 0.0
  %128 = vmatpush1.msra.mxu0 0.0
  %129 = vmatprep.subr.mxu0 0.0
  %130 = vmatpush1.msra.mxu0 0.0
  %131 = vmatprep.subr.mxu0 0.0
  %132 = vmatpush1.msra.mxu0 0.0
  %133 = vmatprep.subr.mxu0 0.0
  %134 = vmatpush1.msra.mxu0 0.0
  %135 = vmatprep.subr.mxu0 0.0
  %136 = vmatpush1.msra.mxu0 0.0
  %137 = vmatprep.subr.mxu0 0.0
  %138 = vmatpush1.msra.mxu0 0.0
  %139 = vmatprep.subr.mxu0 0.0
  %140 = vmatpush1.msra.mxu0 0.0
  %141 = vmatprep.subr.mxu0 0.0
  %142 = vmatpush1.msra.mxu0 0.0
  %143 = vmatprep.subr.mxu0 0.0
  %144 = vmatpush1.msra.mxu0 0.0
  %145 = vmatprep.subr.mxu0 0.0
  %146 = vmatpush1.msra.mxu0 0.0
  %147 = vmatprep.subr.mxu0 0.0
  %148 = vmatpush1.msra.mxu0 0.0
  %149 = vmatprep.subr.mxu0 0.0
  %150 = vmatpush1.msra.mxu0 0.0
  %151 = vmatprep.subr.mxu0 0.0
  %152 = vmatpush1.msra.mxu0 0.0
  %153 = vmatprep.subr.mxu0 0.0
  %154 = vmatpush1.msra.mxu0 0.0
  %155 = vmatprep.subr.mxu0 0.0
  %156 = vmatpush1.msra.mxu0 0.0
  %157 = vmatprep.subr.mxu0 0.0
  %158 = vmatpush1.msra.mxu0 0.0
  %159 = vmatprep.subr.mxu0 0.0
  %160 = vmatpush1.msra.mxu0 0.0
  %161 = vmatprep.subr.mxu0 0.0
  %162 = vmatpush1.msra.mxu0 0.0
  %163 = vmatprep.subr.mxu0 0.0
  %164 = vmatpush1.msra.mxu0 0.0
  %165 = vmatprep.subr.mxu0 0.0
  %166 = vmatpush1.msra.mxu0 0.0
  %167 = vmatprep.subr.mxu0 0.0
  %168 = vmatpush1.msra.mxu0 0.0
  %169 = vmatprep.subr.mxu0 0.0
  %170 = vmatpush1.msra.mxu0 0.0
  %171 = vmatprep.subr.mxu0 0.0
  %172 = vmatpush1.msra.mxu0 0.0
  %173 = vmatprep.subr.mxu0 0.0
  %174 = vmatpush1.msra.mxu0 0.0
  %175 = vmatprep.subr.mxu0 0.0
  %176 = vmatpush1.msra.mxu0 0.0
  %177 = vmatprep.subr.mxu0 0.0
  %178 = vmatpush1.msra.mxu0 0.0
  %179 = vmatprep.subr.mxu0 0.0
  %180 = vmatpush1.msra.mxu0 0.0
  %181 = vmatprep.subr.mxu0 0.0
  %182 = vmatpush1.msra.mxu0 0.0
  %183 = vmatprep.mubr.f32.mxu0 0.0
  %184 = vmatmul.mubr.f32.gmra.mrb[0].mxu0 %v68
  %v185 = vpop.f32.mrb[0].mxu0
  %v186 = vadd.f32 %v64, %v185
  %v187 = vpop.f32.mrb[0].mxu0
  %188 = vmatprep.mubr.f32.mxu0 0.0
  %189 = vmatmul.mubr.f32.gmra.mrb[0].mxu0 %v71
  %v190 = vpop.f32.mrb[0].mxu0
  %v191 = vadd.f32 %v64, %v190
  %v192 = vpop.f32.mrb[0].mxu0
  %193 = vmatprep.mubr.f32.mxu0 0.0
  %194 = vmatmul.mubr.f32.gmra.mrb[0].mxu0 %v74
  %v195 = vpop.f32.mrb[0].mxu0
  %v196 = vadd.f32 %v64, %v195
  %v197 = vpop.f32.mrb[0].mxu0
  %198 = vmatprep.mubr.f32.mxu0 0.0
  %199 = vmatmul.mubr.f32.gmra.mrb[0].mxu0 %v77
  %v200 = vpop.f32.mrb[0].mxu0
  %v201 = vadd.f32 %v64, %v200
  %v202 = vpop.f32.mrb[0].mxu0
  %203 = vmatprep.mubr.f32.mxu0 0.0
  %204 = vmatmul.mubr.f32.gmra.mrb[0].mxu0 %v80
  %v205 = vpop.f32.mrb[0].mxu0
  %v206 = vadd.f32 %v64, %v205
  %v207 = vpop.f32.mrb[0].mxu0
  %208 = vmatprep.mubr.f32.mxu0 0.0
  %209 = vmatmul.mubr.f32.gmra.mrb[0].mxu0 %v83
  %v210 = vpop.f32.mrb[0].mxu0
  %v211 = vadd.f32 %v64, %v210
  %v212 = vpop.f32.mrb[0].mxu0
  %213 = vmatprep.mubr.f32.mxu0 0.0
  %214 = vmatmul.mubr.f32.gmra.mrb[0].mxu0 %v86
  %v215 = vpop.f32.mrb[0].mxu0
  %v216 = vadd.f32 %v64, %v215
  %v217 = vpop.f32.mrb[0].mxu0
  %218 = vmatprep.mubr.f32.mxu0 0.0
  %219 = vmatmul.mubr.f32.gmra.mrb[0].mxu0 %v89
  %v220 = vpop.f32.mrb[0].mxu0
  %v221 = vadd.f32 %v64, %v220
  %v222 = vpop.f32.mrb[0].mxu0
  %223 = vmatprep.mubr.f32.mxu0 0.0
  %224 = vmatmul.mubr.f32.gmra.mrb[0].mxu0 %v92
  %v225 = vpop.f32.mrb[0].mxu0
  %v226 = vadd.f32 %v64, %v225
  %v227 = vpop.f32.mrb[0].mxu0
  %228 = vmatprep.mubr.f32.mxu0 0.0
  %229 = vmatmul.mubr.f32.gmra.mrb[0].mxu0 %v95
  %v230 = vpop.f32.mrb[0].mxu0
  %v231 = vadd.f32 %v64, %v230
  %v232 = vpop.f32.mrb[0].mxu0
  %233 = vmatprep.mubr.f32.mxu0 0.0
  %234 = vmatmul.mubr.f32.gmra.mrb[0].mxu0 %v98
  %v235 = vpop.f32.mrb[0].mxu0
  %v236 = vadd.f32 %v64, %v235
  %v237 = vpop.f32.mrb[0].mxu0
  %238 = vmatprep.mubr.f32.mxu0 0.0
  %239 = vmatmul.mubr.f32.gmra.mrb[0].mxu0 %v101
  %v240 = vpop.f32.mrb[0].mxu0
  %v241 = vadd.f32 %v64, %v240
  %v242 = vpop.f32.mrb[0].mxu0
  %243 = vmatprep.mubr.f32.mxu0 0.0
  %244 = vmatmul.mubr.f32.gmra.mrb[0].mxu0 %v104
  %v245 = vpop.f32.mrb[0].mxu0
  %v246 = vadd.f32 %v64, %v245
  %v247 = vpop.f32.mrb[0].mxu0
  %248 = vmatprep.mubr.f32.mxu0 0.0
  %249 = vmatmul.mubr.f32.gmra.mrb[0].mxu0 %v107
  %v250 = vpop.f32.mrb[0].mxu0
  %v251 = vadd.f32 %v64, %v250
  %v252 = vpop.f32.mrb[0].mxu0
  %253 = vmatprep.mubr.f32.mxu0 0.0
  %254 = vmatmul.mubr.f32.gmra.mrb[0].mxu0 %v110
  %v255 = vpop.f32.mrb[0].mxu0
  %v256 = vadd.f32 %v64, %v255
  %v257 = vpop.f32.mrb[0].mxu0
  %258 = vmatprep.mubr.f32.mxu0 0.0
  %259 = vmatmul.mubr.f32.gmra.mrb[0].mxu0 %v113
  %v260 = vpop.f32.mrb[0].mxu0
  %v261 = vadd.f32 %v64, %v260
  %v262 = vpop.f32.mrb[0].mxu0
  %263 = vdwg.mxu0
  %vm264 = vcmask 523264
  %v265 = vsel %vm264, %v186, 0.0
  %v266 = vsel %vm264, %v191, 0.0
  %v267 = vadd.f32 %v265, %v266
  %v268 = vsel %vm264, %v196, 0.0
  %v269 = vadd.f32 %v267, %v268
  %v270 = vsel %vm264, %v201, 0.0
  %v271 = vadd.f32 %v269, %v270
  %v272 = vsel %vm264, %v206, 0.0
  %v273 = vadd.f32 %v271, %v272
  %v274 = vsel %vm264, %v211, 0.0
  %v275 = vadd.f32 %v273, %v274
  %v276 = vsel %vm264, %v216, 0.0
  %v277 = vadd.f32 %v275, %v276
  %v278 = vsel %vm264, %v221, 0.0
  %v279 = vadd.f32 %v277, %v278
  %v280 = vsel %vm264, %v226, 0.0
  %v281 = vadd.f32 %v279, %v280
  %v282 = vsel %vm264, %v231, 0.0
  %v283 = vadd.f32 %v281, %v282
  %v284 = vsel %vm264, %v236, 0.0
  %v285 = vadd.f32 %v283, %v284
  %v286 = vsel %vm264, %v241, 0.0
  %v287 = vadd.f32 %v285, %v286
  %v288 = vsel %vm264, %v246, 0.0
  %v289 = vadd.f32 %v287, %v288
  %v290 = vsel %vm264, %v251, 0.0
  %v291 = vadd.f32 %v289, %v290
  %v292 = vsel %vm264, %v256, 0.0
  %v293 = vadd.f32 %v291, %v292
  %v294 = vsel %vm264, %v261, 0.0
  %v295 = vadd.f32 %v293, %v294
  %v296 = vrot.slane %v295, 4
  %v297 = vadd.f32 %v295, %v296
  %v298 = vrot.slane %v297, 2
  %v299 = vadd.f32 %v297, %v298
  %v300 = vrot.slane %v299, 1
  %v301 = vadd.f32 %v299, %v300
  %v302 = vrcp.pop 128.0
  %v303 = vmul.f32 %v301, %v302
  %v304 = vsub.f32 %v186, %v303
  %v305 = vsub.f32 %v191, %v303
  %v306 = vsub.f32 %v196, %v303
  %v307 = vsub.f32 %v201, %v303
  %v308 = vsub.f32 %v206, %v303
  %v309 = vsub.f32 %v211, %v303
  %v310 = vsub.f32 %v216, %v303
  %v311 = vsub.f32 %v221, %v303
  %v312 = vsub.f32 %v226, %v303
  %v313 = vsub.f32 %v231, %v303
  %v314 = vsub.f32 %v236, %v303
  %v315 = vsub.f32 %v241, %v303
  %v316 = vsub.f32 %v246, %v303
  %v317 = vsub.f32 %v251, %v303
  %v318 = vsub.f32 %v256, %v303
  %v319 = vsub.f32 %v261, %v303
  %v320 = vmul.f32 %v304, %v304
  %v321 = vmul.f32 %v305, %v305
  %v322 = vmul.f32 %v306, %v306
  %v323 = vmul.f32 %v307, %v307
  %v324 = vmul.f32 %v308, %v308
  %v325 = vmul.f32 %v309, %v309
  %v326 = vmul.f32 %v310, %v310
  %v327 = vmul.f32 %v311, %v311
  %v328 = vmul.f32 %v312, %v312
  %v329 = vmul.f32 %v313, %v313
  %v330 = vmul.f32 %v314, %v314
  %v331 = vmul.f32 %v315, %v315
  %v332 = vmul.f32 %v316, %v316
  %v333 = vmul.f32 %v317, %v317
  %v334 = vmul.f32 %v318, %v318
  %v335 = vmul.f32 %v319, %v319
  %v336 = vsel %vm264, %v320, 0.0
  %v337 = vsel %vm264, %v321, 0.0
  %v338 = vadd.f32 %v336, %v337
  %v339 = vsel %vm264, %v322, 0.0
  %v340 = vadd.f32 %v338, %v339
  %v341 = vsel %vm264, %v323, 0.0
  %v342 = vadd.f32 %v340, %v341
  %v343 = vsel %vm264, %v324, 0.0
  %v344 = vadd.f32 %v342, %v343
  %v345 = vsel %vm264, %v325, 0.0
  %v346 = vadd.f32 %v344, %v345
  %v347 = vsel %vm264, %v326, 0.0
  %v348 = vadd.f32 %v346, %v347
  %v349 = vsel %vm264, %v327, 0.0
  %v350 = vadd.f32 %v348, %v349
  %v351 = vsel %vm264, %v328, 0.0
  %v352 = vadd.f32 %v350, %v351
  %v353 = vsel %vm264, %v329, 0.0
  %v354 = vadd.f32 %v352, %v353
  %v355 = vsel %vm264, %v330, 0.0
  %v356 = vadd.f32 %v354, %v355
  %v357 = vsel %vm264, %v331, 0.0
  %v358 = vadd.f32 %v356, %v357
  %v359 = vsel %vm264, %v332, 0.0
  %v360 = vadd.f32 %v358, %v359
  %v361 = vsel %vm264, %v333, 0.0
  %v362 = vadd.f32 %v360, %v361
  %v363 = vsel %vm264, %v334, 0.0
  %v364 = vadd.f32 %v362, %v363
  %v365 = vsel %vm264, %v335, 0.0
  %v366 = vadd.f32 %v364, %v365
  %v367 = vrot.slane %v366, 4
  %v368 = vadd.f32 %v366, %v367
  %v369 = vrot.slane %v368, 2
  %v370 = vadd.f32 %v368, %v369
  %v371 = vrot.slane %v370, 1
  %v372 = vadd.f32 %v370, %v371
  %v373 = vmul.f32 %v372, %v302
  %v374 = vadd.f32 %v373, 1e-05
  %v375 = vrsqrt.pop %v374
  %v376 = vmul.f32 %v304, %v375
  %v377 = vmul.f32 %v305, %v375
  %v378 = vmul.f32 %v306, %v375
  %v379 = vmul.f32 %v307, %v375
  %v380 = vmul.f32 %v308, %v375
  %v381 = vmul.f32 %v309, %v375
  %v382 = vmul.f32 %v310, %v375
  %v383 = vmul.f32 %v311, %v375
  %v384 = vmul.f32 %v312, %v375
  %v385 = vmul.f32 %v313, %v375
  %v386 = vmul.f32 %v314, %v375
  %v387 = vmul.f32 %v315, %v375
  %v388 = vmul.f32 %v316, %v375
  %v389 = vmul.f32 %v317, %v375
  %v390 = vmul.f32 %v318, %v375
  %v391 = vmul.f32 %v319, %v375
  %v392 = vld [vmem:[%s3] sm:$0x1]
  %v394 = vlaneseq
  %v395 = vshrl.u32 %v394, 7
  %v396 = vsub.s32 0, %v395
  %v397 = vrot.slane %v392, %v396
  %v399 = vmul.f32 %v376, %v397
  %v400 = vmul.f32 %v377, %v397
  %v401 = vmul.f32 %v378, %v397
  %v402 = vmul.f32 %v379, %v397
  %v403 = vmul.f32 %v380, %v397
  %v404 = vmul.f32 %v381, %v397
  %v405 = vmul.f32 %v382, %v397
  %v406 = vmul.f32 %v383, %v397
  %v407 = vmul.f32 %v384, %v397
  %v408 = vmul.f32 %v385, %v397
  %v409 = vmul.f32 %v386, %v397
  %v410 = vmul.f32 %v387, %v397
  %v411 = vmul.f32 %v388, %v397
  %v412 = vmul.f32 %v389, %v397
  %v413 = vmul.f32 %v390, %v397
  %v414 = vmul.f32 %v391, %v397
  %v415 = vld [vmem:[%s4] sm:$0x1]
  %v417 = vlaneseq
  %v418 = vshrl.u32 %v417, 7
  %v419 = vsub.s32 0, %v418
  %v420 = vrot.slane %v415, %v419
  %v422 = vadd.f32 %v399, %v420
  %v423 = vadd.f32 %v400, %v420
  %v424 = vadd.f32 %v401, %v420
  %v425 = vadd.f32 %v402, %v420
  %v426 = vadd.f32 %v403, %v420
  %v427 = vadd.f32 %v404, %v420
  %v428 = vadd.f32 %v405, %v420
  %v429 = vadd.f32 %v406, %v420
  %v430 = vadd.f32 %v407, %v420
  %v431 = vadd.f32 %v408, %v420
  %v432 = vadd.f32 %v409, %v420
  %v433 = vadd.f32 %v410, %v420
  %v434 = vadd.f32 %v411, %v420
  %v435 = vadd.f32 %v412, %v420
  %v436 = vadd.f32 %v413, %v420
  %v437 = vadd.f32 %v414, %v420
  %v438 = vmax.f32 %v422, 0.0
  %v439 = vmax.f32 %v423, 0.0
  %v440 = vmax.f32 %v424, 0.0
  %v441 = vmax.f32 %v425, 0.0
  %v442 = vmax.f32 %v426, 0.0
  %v443 = vmax.f32 %v427, 0.0
  %v444 = vmax.f32 %v428, 0.0
  %v445 = vmax.f32 %v429, 0.0
  %v446 = vmax.f32 %v430, 0.0
  %v447 = vmax.f32 %v431, 0.0
  %v448 = vmax.f32 %v432, 0.0
  %v449 = vmax.f32 %v433, 0.0
  %v450 = vmax.f32 %v434, 0.0
  %v451 = vmax.f32 %v435, 0.0
  %v452 = vmax.f32 %v436, 0.0
  %v453 = vmax.f32 %v437, 0.0
  %v454 = vld [vmem:[%s5] sm:$0xff]
  %v455 = vld [vmem:[%s5 + $0x8] sm:$0xff]
  %v456 = vld [vmem:[%s5 + $0x10] sm:$0xff]
  %v457 = vld [vmem:[%s5 + $0x18] sm:$0xff]
  %v458 = vld [vmem:[%s5 + $0x20] sm:$0xff]
  %v459 = vld [vmem:[%s5 + $0x28] sm:$0xff]
  %v460 = vld [vmem:[%s5 + $0x30] sm:$0xff]
  %v461 = vld [vmem:[%s5 + $0x38] sm:$0xff]
  %v462 = vld [vmem:[%s5 + $0x40] sm:$0xff]
  %v463 = vld [vmem:[%s5 + $0x48] sm:$0xff]
  %v464 = vld [vmem:[%s5 + $0x50] sm:$0xff]
  %v465 = vld [vmem:[%s5 + $0x58] sm:$0xff]
  %v466 = vld [vmem:[%s5 + $0x60] sm:$0xff]
  %v467 = vld [vmem:[%s5 + $0x68] sm:$0xff]
  %v468 = vld [vmem:[%s5 + $0x70] sm:$0xff]
  %v469 = vld [vmem:[%s5 + $0x78] sm:$0xff]
  %v470 = vld [vmem:[%s5 + $0x80] sm:$0xff]
  %v471 = vld [vmem:[%s5 + $0x88] sm:$0xff]
  %v472 = vld [vmem:[%s5 + $0x90] sm:$0xff]
  %v473 = vld [vmem:[%s5 + $0x98] sm:$0xff]
  %v474 = vld [vmem:[%s5 + $0xa0] sm:$0xff]
  %v475 = vld [vmem:[%s5 + $0xa8] sm:$0xff]
  %v476 = vld [vmem:[%s5 + $0xb0] sm:$0xff]
  %v477 = vld [vmem:[%s5 + $0xb8] sm:$0xff]
  %v478 = vld [vmem:[%s5 + $0xc0] sm:$0xff]
  %v479 = vld [vmem:[%s5 + $0xc8] sm:$0xff]
  %v480 = vld [vmem:[%s5 + $0xd0] sm:$0xff]
  %v481 = vld [vmem:[%s5 + $0xd8] sm:$0xff]
  %v482 = vld [vmem:[%s5 + $0xe0] sm:$0xff]
  %v483 = vld [vmem:[%s5 + $0xe8] sm:$0xff]
  %v484 = vld [vmem:[%s5 + $0xf0] sm:$0xff]
  %v485 = vld [vmem:[%s5 + $0xf8] sm:$0xff]
  %v486 = vld [vmem:[%s5 + $0x100] sm:$0xff]
  %v487 = vld [vmem:[%s5 + $0x108] sm:$0xff]
  %v488 = vld [vmem:[%s5 + $0x110] sm:$0xff]
  %v489 = vld [vmem:[%s5 + $0x118] sm:$0xff]
  %490 = vmatprep.subr.mxu0 0.0
  %491 = vmatpush1.msra.mxu0 %v438
  %492 = vmatprep.subr.mxu0 0.0
  %493 = vmatpush1.msra.mxu0 %v439
  %494 = vmatprep.subr.mxu0 0.0
  %495 = vmatpush1.msra.mxu0 %v440
  %496 = vmatprep.subr.mxu0 0.0
  %497 = vmatpush1.msra.mxu0 %v441
  %498 = vmatprep.subr.mxu0 0.0
  %499 = vmatpush1.msra.mxu0 %v442
  %500 = vmatprep.subr.mxu0 0.0
  %501 = vmatpush1.msra.mxu0 %v443
  %502 = vmatprep.subr.mxu0 0.0
  %503 = vmatpush1.msra.mxu0 %v444
  %504 = vmatprep.subr.mxu0 0.0
  %505 = vmatpush1.msra.mxu0 %v445
  %506 = vmatprep.subr.mxu0 0.0
  %507 = vmatpush1.msra.mxu0 %v446
  %508 = vmatprep.subr.mxu0 0.0
  %509 = vmatpush1.msra.mxu0 %v447
  %510 = vmatprep.subr.mxu0 0.0
  %511 = vmatpush1.msra.mxu0 %v448
  %512 = vmatprep.subr.mxu0 0.0
  %513 = vmatpush1.msra.mxu0 %v449
  %514 = vmatprep.subr.mxu0 0.0
  %515 = vmatpush1.msra.mxu0 %v450
  %516 = vmatprep.subr.mxu0 0.0
  %517 = vmatpush1.msra.mxu0 %v451
  %518 = vmatprep.subr.mxu0 0.0
  %519 = vmatpush1.msra.mxu0 %v452
  %520 = vmatprep.subr.mxu0 0.0
  %521 = vmatpush1.msra.mxu0 %v453
  %522 = vmatprep.subr.mxu0 0.0
  %523 = vmatpush1.msra.mxu0 0.0
  %524 = vmatprep.subr.mxu0 0.0
  %525 = vmatpush1.msra.mxu0 0.0
  %526 = vmatprep.subr.mxu0 0.0
  %527 = vmatpush1.msra.mxu0 0.0
  %528 = vmatprep.subr.mxu0 0.0
  %529 = vmatpush1.msra.mxu0 0.0
  %530 = vmatprep.subr.mxu0 0.0
  %531 = vmatpush1.msra.mxu0 0.0
  %532 = vmatprep.subr.mxu0 0.0
  %533 = vmatpush1.msra.mxu0 0.0
  %534 = vmatprep.subr.mxu0 0.0
  %535 = vmatpush1.msra.mxu0 0.0
  %536 = vmatprep.subr.mxu0 0.0
  %537 = vmatpush1.msra.mxu0 0.0
  %538 = vmatprep.subr.mxu0 0.0
  %539 = vmatpush1.msra.mxu0 0.0
  %540 = vmatprep.subr.mxu0 0.0
  %541 = vmatpush1.msra.mxu0 0.0
  %542 = vmatprep.subr.mxu0 0.0
  %543 = vmatpush1.msra.mxu0 0.0
  %544 = vmatprep.subr.mxu0 0.0
  %545 = vmatpush1.msra.mxu0 0.0
  %546 = vmatprep.subr.mxu0 0.0
  %547 = vmatpush1.msra.mxu0 0.0
  %548 = vmatprep.subr.mxu0 0.0
  %549 = vmatpush1.msra.mxu0 0.0
  %550 = vmatprep.subr.mxu0 0.0
  %551 = vmatpush1.msra.mxu0 0.0
  %552 = vmatprep.subr.mxu0 0.0
  %553 = vmatpush1.msra.mxu0 0.0
  %554 = vmatprep.mubr.f32.mxu0 0.0
  %555 = vmatmul.mubr.f32.gmra.mrb[0].mxu0 %v454
  %v556 = vpop.f32.mrb[0].mxu0
  %v557 = vadd.f32 0.0, %v556
  %v558 = vpop.f32.mrb[0].mxu0
  %559 = vmatprep.mubr.f32.mxu0 0.0
  %560 = vmatmul.mubr.f32.gmra.mrb[0].mxu0 %v455
  %v561 = vpop.f32.mrb[0].mxu0
  %v562 = vadd.f32 0.0, %v561
  %v563 = vpop.f32.mrb[0].mxu0
  %564 = vmatprep.mubr.f32.mxu0 0.0
  %565 = vmatmul.mubr.f32.gmra.mrb[0].mxu0 %v456
  %v566 = vpop.f32.mrb[0].mxu0
  %v567 = vadd.f32 0.0, %v566
  %v568 = vpop.f32.mrb[0].mxu0
  %569 = vmatprep.mubr.f32.mxu0 0.0
  %570 = vmatmul.mubr.f32.gmra.mrb[0].mxu0 %v457
  %v571 = vpop.f32.mrb[0].mxu0
  %v572 = vadd.f32 0.0, %v571
  %v573 = vpop.f32.mrb[0].mxu0
  %574 = vmatprep.mubr.f32.mxu0 0.0
  %575 = vmatmul.mubr.f32.gmra.mrb[0].mxu0 %v458
  %v576 = vpop.f32.mrb[0].mxu0
  %v577 = vadd.f32 0.0, %v576
  %v578 = vpop.f32.mrb[0].mxu0
  %579 = vmatprep.mubr.f32.mxu0 0.0
  %580 = vmatmul.mubr.f32.gmra.mrb[0].mxu0 %v459
  %v581 = vpop.f32.mrb[0].mxu0
  %v582 = vadd.f32 0.0, %v581
  %v583 = vpop.f32.mrb[0].mxu0
  %584 = vmatprep.mubr.f32.mxu0 0.0
  %585 = vmatmul.mubr.f32.gmra.mrb[0].mxu0 %v460
  %v586 = vpop.f32.mrb[0].mxu0
  %v587 = vadd.f32 0.0, %v586
  %v588 = vpop.f32.mrb[0].mxu0
  %589 = vmatprep.mubr.f32.mxu0 0.0
  %590 = vmatmul.mubr.f32.gmra.mrb[0].mxu0 %v461
  %v591 = vpop.f32.mrb[0].mxu0
  %v592 = vadd.f32 0.0, %v591
  %v593 = vpop.f32.mrb[0].mxu0
  %594 = vmatprep.mubr.f32.mxu0 0.0
  %595 = vmatmul.mubr.f32.gmra.mrb[0].mxu0 %v462
  %v596 = vpop.f32.mrb[0].mxu0
  %v597 = vadd.f32 0.0, %v596
  %v598 = vpop.f32.mrb[0].mxu0
  %599 = vmatprep.mubr.f32.mxu0 0.0
  %600 = vmatmul.mubr.f32.gmra.mrb[0].mxu0 %v463
  %v601 = vpop.f32.mrb[0].mxu0
  %v602 = vadd.f32 0.0, %v601
  %v603 = vpop.f32.mrb[0].mxu0
  %604 = vmatprep.mubr.f32.mxu0 0.0
  %605 = vmatmul.mubr.f32.gmra.mrb[0].mxu0 %v464
  %v606 = vpop.f32.mrb[0].mxu0
  %v607 = vadd.f32 0.0, %v606
  %v608 = vpop.f32.mrb[0].mxu0
  %609 = vmatprep.mubr.f32.mxu0 0.0
  %610 = vmatmul.mubr.f32.gmra.mrb[0].mxu0 %v465
  %v611 = vpop.f32.mrb[0].mxu0
  %v612 = vadd.f32 0.0, %v611
  %v613 = vpop.f32.mrb[0].mxu0
  %614 = vmatprep.mubr.f32.mxu0 0.0
  %615 = vmatmul.mubr.f32.gmra.mrb[0].mxu0 %v466
  %v616 = vpop.f32.mrb[0].mxu0
  %v617 = vadd.f32 0.0, %v616
  %v618 = vpop.f32.mrb[0].mxu0
  %619 = vmatprep.mubr.f32.mxu0 0.0
  %620 = vmatmul.mubr.f32.gmra.mrb[0].mxu0 %v467
  %v621 = vpop.f32.mrb[0].mxu0
  %v622 = vadd.f32 0.0, %v621
  %v623 = vpop.f32.mrb[0].mxu0
  %624 = vmatprep.mubr.f32.mxu0 0.0
  %625 = vmatmul.mubr.f32.gmra.mrb[0].mxu0 %v468
  %v626 = vpop.f32.mrb[0].mxu0
  %v627 = vadd.f32 0.0, %v626
  %v628 = vpop.f32.mrb[0].mxu0
  %629 = vmatprep.mubr.f32.mxu0 0.0
  %630 = vmatmul.mubr.f32.gmra.mrb[0].mxu0 %v469
  %v631 = vpop.f32.mrb[0].mxu0
  %v632 = vadd.f32 0.0, %v631
  %v633 = vpop.f32.mrb[0].mxu0
  %634 = vmatprep.mubr.f32.mxu0 0.0
  %635 = vmatmul.mubr.f32.gmra.mrb[0].mxu0 %v470
  %v636 = vpop.f32.mrb[0].mxu0
  %v637 = vadd.f32 0.0, %v636
  %v638 = vpop.f32.mrb[0].mxu0
  %639 = vmatprep.mubr.f32.mxu0 0.0
  %640 = vmatmul.mubr.f32.gmra.mrb[0].mxu0 %v471
  %v641 = vpop.f32.mrb[0].mxu0
  %v642 = vadd.f32 0.0, %v641
  %v643 = vpop.f32.mrb[0].mxu0
  %644 = vmatprep.mubr.f32.mxu0 0.0
  %645 = vmatmul.mubr.f32.gmra.mrb[0].mxu0 %v472
  %v646 = vpop.f32.mrb[0].mxu0
  %v647 = vadd.f32 0.0, %v646
  %v648 = vpop.f32.mrb[0].mxu0
  %649 = vmatprep.mubr.f32.mxu0 0.0
  %650 = vmatmul.mubr.f32.gmra.mrb[0].mxu0 %v473
  %v651 = vpop.f32.mrb[0].mxu0
  %v652 = vadd.f32 0.0, %v651
  %v653 = vpop.f32.mrb[0].mxu0
  %654 = vmatprep.mubr.f32.mxu0 0.0
  %655 = vmatmul.mubr.f32.gmra.mrb[0].mxu0 %v474
  %v656 = vpop.f32.mrb[0].mxu0
  %v657 = vadd.f32 0.0, %v656
  %v658 = vpop.f32.mrb[0].mxu0
  %659 = vmatprep.mubr.f32.mxu0 0.0
  %660 = vmatmul.mubr.f32.gmra.mrb[0].mxu0 %v475
  %v661 = vpop.f32.mrb[0].mxu0
  %v662 = vadd.f32 0.0, %v661
  %v663 = vpop.f32.mrb[0].mxu0
  %664 = vmatprep.mubr.f32.mxu0 0.0
  %665 = vmatmul.mubr.f32.gmra.mrb[0].mxu0 %v476
  %v666 = vpop.f32.mrb[0].mxu0
  %v667 = vadd.f32 0.0, %v666
  %v668 = vpop.f32.mrb[0].mxu0
  %669 = vmatprep.mubr.f32.mxu0 0.0
  %670 = vmatmul.mubr.f32.gmra.mrb[0].mxu0 %v477
  %v671 = vpop.f32.mrb[0].mxu0
  %v672 = vadd.f32 0.0, %v671
  %v673 = vpop.f32.mrb[0].mxu0
  %674 = vmatprep.mubr.f32.mxu0 0.0
  %675 = vmatmul.mubr.f32.gmra.mrb[0].mxu0 %v478
  %v676 = vpop.f32.mrb[0].mxu0
  %v677 = vadd.f32 0.0, %v676
  %v678 = vpop.f32.mrb[0].mxu0
  %679 = vmatprep.mubr.f32.mxu0 0.0
  %680 = vmatmul.mubr.f32.gmra.mrb[0].mxu0 %v479
  %v681 = vpop.f32.mrb[0].mxu0
  %v682 = vadd.f32 0.0, %v681
  %v683 = vpop.f32.mrb[0].mxu0
  %684 = vmatprep.mubr.f32.mxu0 0.0
  %685 = vmatmul.mubr.f32.gmra.mrb[0].mxu0 %v480
  %v686 = vpop.f32.mrb[0].mxu0
  %v687 = vadd.f32 0.0, %v686
  %v688 = vpop.f32.mrb[0].mxu0
  %689 = vmatprep.mubr.f32.mxu0 0.0
  %690 = vmatmul.mubr.f32.gmra.mrb[0].mxu0 %v481
  %v691 = vpop.f32.mrb[0].mxu0
  %v692 = vadd.f32 0.0, %v691
  %v693 = vpop.f32.mrb[0].mxu0
  %694 = vmatprep.mubr.f32.mxu0 0.0
  %695 = vmatmul.mubr.f32.gmra.mrb[0].mxu0 %v482
  %v696 = vpop.f32.mrb[0].mxu0
  %v697 = vadd.f32 0.0, %v696
  %v698 = vpop.f32.mrb[0].mxu0
  %699 = vmatprep.mubr.f32.mxu0 0.0
  %700 = vmatmul.mubr.f32.gmra.mrb[0].mxu0 %v483
  %v701 = vpop.f32.mrb[0].mxu0
  %v702 = vadd.f32 0.0, %v701
  %v703 = vpop.f32.mrb[0].mxu0
  %704 = vmatprep.mubr.f32.mxu0 0.0
  %705 = vmatmul.mubr.f32.gmra.mrb[0].mxu0 %v484
  %v706 = vpop.f32.mrb[0].mxu0
  %v707 = vadd.f32 0.0, %v706
  %v708 = vpop.f32.mrb[0].mxu0
  %709 = vmatprep.mubr.f32.mxu0 0.0
  %710 = vmatmul.mubr.f32.gmra.mrb[0].mxu0 %v485
  %v711 = vpop.f32.mrb[0].mxu0
  %v712 = vadd.f32 0.0, %v711
  %v713 = vpop.f32.mrb[0].mxu0
  %714 = vmatprep.mubr.f32.mxu0 0.0
  %715 = vmatmul.mubr.f32.gmra.mrb[0].mxu0 %v486
  %v716 = vpop.f32.mrb[0].mxu0
  %v717 = vadd.f32 0.0, %v716
  %v718 = vpop.f32.mrb[0].mxu0
  %719 = vmatprep.mubr.f32.mxu0 0.0
  %720 = vmatmul.mubr.f32.gmra.mrb[0].mxu0 %v487
  %v721 = vpop.f32.mrb[0].mxu0
  %v722 = vadd.f32 0.0, %v721
  %v723 = vpop.f32.mrb[0].mxu0
  %724 = vmatprep.mubr.f32.mxu0 0.0
  %725 = vmatmul.mubr.f32.gmra.mrb[0].mxu0 %v488
  %v726 = vpop.f32.mrb[0].mxu0
  %v727 = vadd.f32 0.0, %v726
  %v728 = vpop.f32.mrb[0].mxu0
  %729 = vmatprep.mubr.f32.mxu0 0.0
  %730 = vmatmul.mubr.f32.gmra.mrb[0].mxu0 %v489
  %v731 = vpop.f32.mrb[0].mxu0
  %v732 = vadd.f32 0.0, %v731
  %v733 = vpop.f32.mrb[0].mxu0
  %734 = vdwg.mxu0
  %v735 = vld [vmem:[%s6] sm:$0xff]
  %v736 = vld [vmem:[%s6 + $0x8] sm:$0xff]
  %v737 = vld [vmem:[%s6 + $0x10] sm:$0xff]
  %v738 = vld [vmem:[%s6 + $0x18] sm:$0xff]
  %v739 = vld [vmem:[%s6 + $0x20] sm:$0xff]
  %v740 = vld [vmem:[%s6 + $0x28] sm:$0xff]
  %v741 = vld [vmem:[%s6 + $0x30] sm:$0xff]
  %v742 = vld [vmem:[%s6 + $0x38] sm:$0xff]
  %v743 = vld [vmem:[%s6 + $0x40] sm:$0xff]
  %v744 = vld [vmem:[%s6 + $0x48] sm:$0xff]
  %v745 = vld [vmem:[%s6 + $0x50] sm:$0xff]
  %v746 = vld [vmem:[%s6 + $0x58] sm:$0xff]
  %v747 = vld [vmem:[%s6 + $0x60] sm:$0xff]
  %v748 = vld [vmem:[%s6 + $0x68] sm:$0xff]
  %v749 = vld [vmem:[%s6 + $0x70] sm:$0xff]
  %v750 = vld [vmem:[%s6 + $0x78] sm:$0xff]
  %v752 = vsel %vm264, %v577, 0
  %v755 = vsel %vm264, %v582, 0
  %v758 = vsel %vm264, %v587, 0
  %v761 = vsel %vm264, %v592, 0
  %763 = vmatprep.subr.mxu0 0.0
  %764 = vmatpush1.msra.mxu0 %v743
  %765 = vmatprep.subr.mxu0 0.0
  %766 = vmatpush1.msra.mxu0 %v744
  %767 = vmatprep.subr.mxu0 0.0
  %768 = vmatpush1.msra.mxu0 %v745
  %769 = vmatprep.subr.mxu0 0.0
  %770 = vmatpush1.msra.mxu0 %v746
  %771 = vmatprep.subr.mxu0 0.0
  %772 = vmatpush1.msra.mxu0 %v747
  %773 = vmatprep.subr.mxu0 0.0
  %774 = vmatpush1.msra.mxu0 %v748
  %775 = vmatprep.subr.mxu0 0.0
  %776 = vmatpush1.msra.mxu0 %v749
  %777 = vmatprep.subr.mxu0 0.0
  %778 = vmatpush1.msra.mxu0 %v750
  %779 = vmatprep.subr.mxu0 0.0
  %780 = vmatpush1.msra.mxu0 0.0
  %781 = vmatprep.subr.mxu0 0.0
  %782 = vmatpush1.msra.mxu0 0.0
  %783 = vmatprep.subr.mxu0 0.0
  %784 = vmatpush1.msra.mxu0 0.0
  %785 = vmatprep.subr.mxu0 0.0
  %786 = vmatpush1.msra.mxu0 0.0
  %787 = vmatprep.subr.mxu0 0.0
  %788 = vmatpush1.msra.mxu0 0.0
  %789 = vmatprep.subr.mxu0 0.0
  %790 = vmatpush1.msra.mxu0 0.0
  %791 = vmatprep.subr.mxu0 0.0
  %792 = vmatpush1.msra.mxu0 0.0
  %793 = vmatprep.subr.mxu0 0.0
  %794 = vmatpush1.msra.mxu0 0.0
  %795 = vmatprep.subr.mxu0 0.0
  %796 = vmatpush1.msra.mxu0 0.0
  %797 = vmatprep.subr.mxu0 0.0
  %798 = vmatpush1.msra.mxu0 0.0
  %799 = vmatprep.subr.mxu0 0.0
  %800 = vmatpush1.msra.mxu0 0.0
  %801 = vmatprep.subr.mxu0 0.0
  %802 = vmatpush1.msra.mxu0 0.0
  %803 = vmatprep.subr.mxu0 0.0
  %804 = vmatpush1.msra.mxu0 0.0
  %805 = vmatprep.subr.mxu0 0.0
  %806 = vmatpush1.msra.mxu0 0.0
  %807 = vmatprep.subr.mxu0 0.0
  %808 = vmatpush1.msra.mxu0 0.0
  %809 = vmatprep.subr.mxu0 0.0
  %810 = vmatpush1.msra.mxu0 0.0
  %811 = vmatprep.subr.mxu0 0.0
  %812 = vmatpush1.msra.mxu0 0.0
  %813 = vmatprep.subr.mxu0 0.0
  %814 = vmatpush1.msra.mxu0 0.0
  %815 = vmatprep.subr.mxu0 0.0
  %816 = vmatpush1.msra.mxu0 0.0
  %817 = vmatprep.subr.mxu0 0.0
  %818 = vmatpush1.msra.mxu0 0.0
  %819 = vmatprep.subr.mxu0 0.0
  %820 = vmatpush1.msra.mxu0 0.0
  %821 = vmatprep.subr.mxu0 0.0
  %822 = vmatpush1.msra.mxu0 0.0
  %823 = vmatprep.subr.mxu0 0.0
  %824 = vmatpush1.msra.mxu0 0.0
  %825 = vmatprep.subr.mxu0 0.0
  %826 = vmatpush1.msra.mxu0 0.0
  %827 = vmatprep.mubr.f32.mxu0 0.0
  %828 = vmatmul.mubr.f32.gmra.mrb[0].mxu0 %v752
  %v829 = vpop.f32.mrb[0].mxu0
  %v830 = vadd.f32 0.0, %v829
  %v831 = vpop.f32.mrb[0].mxu0
  %832 = vmatprep.mubr.f32.mxu0 0.0
  %833 = vmatmul.mubr.f32.gmra.mrb[0].mxu0 %v755
  %v834 = vpop.f32.mrb[0].mxu0
  %v835 = vadd.f32 0.0, %v834
  %v836 = vpop.f32.mrb[0].mxu0
  %837 = vmatprep.mubr.f32.mxu0 0.0
  %838 = vmatmul.mubr.f32.gmra.mrb[0].mxu0 %v758
  %v839 = vpop.f32.mrb[0].mxu0
  %v840 = vadd.f32 0.0, %v839
  %v841 = vpop.f32.mrb[0].mxu0
  %842 = vmatprep.mubr.f32.mxu0 0.0
  %843 = vmatmul.mubr.f32.gmra.mrb[0].mxu0 %v761
  %v844 = vpop.f32.mrb[0].mxu0
  %v845 = vadd.f32 0.0, %v844
  %v846 = vpop.f32.mrb[0].mxu0
  %847 = vdwg.mxu0
  %v849 = vsel %vm264, %v557, 0
  %v852 = vsel %vm264, %v562, 0
  %v855 = vsel %vm264, %v567, 0
  %v858 = vsel %vm264, %v572, 0
  %860 = vmatprep.subr.mxu0 0.0
  %861 = vmatpush1.msra.mxu0 %v735
  %862 = vmatprep.subr.mxu0 0.0
  %863 = vmatpush1.msra.mxu0 %v736
  %864 = vmatprep.subr.mxu0 0.0
  %865 = vmatpush1.msra.mxu0 %v737
  %866 = vmatprep.subr.mxu0 0.0
  %867 = vmatpush1.msra.mxu0 %v738
  %868 = vmatprep.subr.mxu0 0.0
  %869 = vmatpush1.msra.mxu0 %v739
  %870 = vmatprep.subr.mxu0 0.0
  %871 = vmatpush1.msra.mxu0 %v740
  %872 = vmatprep.subr.mxu0 0.0
  %873 = vmatpush1.msra.mxu0 %v741
  %874 = vmatprep.subr.mxu0 0.0
  %875 = vmatpush1.msra.mxu0 %v742
  %876 = vmatprep.subr.mxu0 0.0
  %877 = vmatpush1.msra.mxu0 0.0
  %878 = vmatprep.subr.mxu0 0.0
  %879 = vmatpush1.msra.mxu0 0.0
  %880 = vmatprep.subr.mxu0 0.0
  %881 = vmatpush1.msra.mxu0 0.0
  %882 = vmatprep.subr.mxu0 0.0
  %883 = vmatpush1.msra.mxu0 0.0
  %884 = vmatprep.subr.mxu0 0.0
  %885 = vmatpush1.msra.mxu0 0.0
  %886 = vmatprep.subr.mxu0 0.0
  %887 = vmatpush1.msra.mxu0 0.0
  %888 = vmatprep.subr.mxu0 0.0
  %889 = vmatpush1.msra.mxu0 0.0
  %890 = vmatprep.subr.mxu0 0.0
  %891 = vmatpush1.msra.mxu0 0.0
  %892 = vmatprep.subr.mxu0 0.0
  %893 = vmatpush1.msra.mxu0 0.0
  %894 = vmatprep.subr.mxu0 0.0
  %895 = vmatpush1.msra.mxu0 0.0
  %896 = vmatprep.subr.mxu0 0.0
  %897 = vmatpush1.msra.mxu0 0.0
  %898 = vmatprep.subr.mxu0 0.0
  %899 = vmatpush1.msra.mxu0 0.0
  %900 = vmatprep.subr.mxu0 0.0
  %901 = vmatpush1.msra.mxu0 0.0
  %902 = vmatprep.subr.mxu0 0.0
  %903 = vmatpush1.msra.mxu0 0.0
  %904 = vmatprep.subr.mxu0 0.0
  %905 = vmatpush1.msra.mxu0 0.0
  %906 = vmatprep.subr.mxu0 0.0
  %907 = vmatpush1.msra.mxu0 0.0
  %908 = vmatprep.subr.mxu0 0.0
  %909 = vmatpush1.msra.mxu0 0.0
  %910 = vmatprep.subr.mxu0 0.0
  %911 = vmatpush1.msra.mxu0 0.0
  %912 = vmatprep.subr.mxu0 0.0
  %913 = vmatpush1.msra.mxu0 0.0
  %914 = vmatprep.subr.mxu0 0.0
  %915 = vmatpush1.msra.mxu0 0.0
  %916 = vmatprep.subr.mxu0 0.0
  %917 = vmatpush1.msra.mxu0 0.0
  %918 = vmatprep.subr.mxu0 0.0
  %919 = vmatpush1.msra.mxu0 0.0
  %920 = vmatprep.subr.mxu0 0.0
  %921 = vmatpush1.msra.mxu0 0.0
  %922 = vmatprep.subr.mxu0 0.0
  %923 = vmatpush1.msra.mxu0 0.0
  %924 = vmatprep.mubr.f32.mxu0 0.0
  %925 = vmatmul.mubr.f32.gmra.mrb[0].mxu0 %v849
  %v926 = vpop.f32.mrb[0].mxu0
  %v927 = vadd.f32 %v830, %v926
  %v928 = vpop.f32.mrb[0].mxu0
  %929 = vmatprep.mubr.f32.mxu0 0.0
  %930 = vmatmul.mubr.f32.gmra.mrb[0].mxu0 %v852
  %v931 = vpop.f32.mrb[0].mxu0
  %v932 = vadd.f32 %v835, %v931
  %v933 = vpop.f32.mrb[0].mxu0
  %934 = vmatprep.mubr.f32.mxu0 0.0
  %935 = vmatmul.mubr.f32.gmra.mrb[0].mxu0 %v855
  %v936 = vpop.f32.mrb[0].mxu0
  %v937 = vadd.f32 %v840, %v936
  %v938 = vpop.f32.mrb[0].mxu0
  %939 = vmatprep.mubr.f32.mxu0 0.0
  %940 = vmatmul.mubr.f32.gmra.mrb[0].mxu0 %v858
  %v941 = vpop.f32.mrb[0].mxu0
  %v942 = vadd.f32 %v845, %v941
  %v943 = vpop.f32.mrb[0].mxu0
  %944 = vdwg.mxu0
  %v945 = vld [vmem:[%s6 + $0x80] sm:$0xff]
  %v946 = vld [vmem:[%s6 + $0x88] sm:$0xff]
  %v947 = vld [vmem:[%s6 + $0x90] sm:$0xff]
  %v948 = vld [vmem:[%s6 + $0x98] sm:$0xff]
  %v949 = vld [vmem:[%s6 + $0xa0] sm:$0xff]
  %v950 = vld [vmem:[%s6 + $0xa8] sm:$0xff]
  %v951 = vld [vmem:[%s6 + $0xb0] sm:$0xff]
  %v952 = vld [vmem:[%s6 + $0xb8] sm:$0xff]
  %v954 = vsel %vm264, %v597, 0
  %v957 = vsel %vm264, %v602, 0
  %v960 = vsel %vm264, %v607, 0
  %v963 = vsel %vm264, %v612, 0
  %965 = vmatprep.subr.mxu0 0.0
  %966 = vmatpush1.msra.mxu0 %v945
  %967 = vmatprep.subr.mxu0 0.0
  %968 = vmatpush1.msra.mxu0 %v946
  %969 = vmatprep.subr.mxu0 0.0
  %970 = vmatpush1.msra.mxu0 %v947
  %971 = vmatprep.subr.mxu0 0.0
  %972 = vmatpush1.msra.mxu0 %v948
  %973 = vmatprep.subr.mxu0 0.0
  %974 = vmatpush1.msra.mxu0 %v949
  %975 = vmatprep.subr.mxu0 0.0
  %976 = vmatpush1.msra.mxu0 %v950
  %977 = vmatprep.subr.mxu0 0.0
  %978 = vmatpush1.msra.mxu0 %v951
  %979 = vmatprep.subr.mxu0 0.0
  %980 = vmatpush1.msra.mxu0 %v952
  %981 = vmatprep.subr.mxu0 0.0
  %982 = vmatpush1.msra.mxu0 0.0
  %983 = vmatprep.subr.mxu0 0.0
  %984 = vmatpush1.msra.mxu0 0.0
  %985 = vmatprep.subr.mxu0 0.0
  %986 = vmatpush1.msra.mxu0 0.0
  %987 = vmatprep.subr.mxu0 0.0
  %988 = vmatpush1.msra.mxu0 0.0
  %989 = vmatprep.subr.mxu0 0.0
  %990 = vmatpush1.msra.mxu0 0.0
  %991 = vmatprep.subr.mxu0 0.0
  %992 = vmatpush1.msra.mxu0 0.0
  %993 = vmatprep.subr.mxu0 0.0
  %994 = vmatpush1.msra.mxu0 0.0
  %995 = vmatprep.subr.mxu0 0.0
  %996 = vmatpush1.msra.mxu0 0.0
  %997 = vmatprep.subr.mxu0 0.0
  %998 = vmatpush1.msra.mxu0 0.0
  %999 = vmatprep.subr.mxu0 0.0
  %1000 = vmatpush1.msra.mxu0 0.0
  %1001 = vmatprep.subr.mxu0 0.0
  %1002 = vmatpush1.msra.mxu0 0.0
  %1003 = vmatprep.subr.mxu0 0.0
  %1004 = vmatpush1.msra.mxu0 0.0
  %1005 = vmatprep.subr.mxu0 0.0
  %1006 = vmatpush1.msra.mxu0 0.0
  %1007 = vmatprep.subr.mxu0 0.0
  %1008 = vmatpush1.msra.mxu0 0.0
  %1009 = vmatprep.subr.mxu0 0.0
  %1010 = vmatpush1.msra.mxu0 0.0
  %1011 = vmatprep.subr.mxu0 0.0
  %1012 = vmatpush1.msra.mxu0 0.0
  %1013 = vmatprep.subr.mxu0 0.0
  %1014 = vmatpush1.msra.mxu0 0.0
  %1015 = vmatprep.subr.mxu0 0.0
  %1016 = vmatpush1.msra.mxu0 0.0
  %1017 = vmatprep.subr.mxu0 0.0
  %1018 = vmatpush1.msra.mxu0 0.0
  %1019 = vmatprep.subr.mxu0 0.0
  %1020 = vmatpush1.msra.mxu0 0.0
  %1021 = vmatprep.subr.mxu0 0.0
  %1022 = vmatpush1.msra.mxu0 0.0
  %1023 = vmatprep.subr.mxu0 0.0
  %1024 = vmatpush1.msra.mxu0 0.0
  %1025 = vmatprep.subr.mxu0 0.0
  %1026 = vmatpush1.msra.mxu0 0.0
  %1027 = vmatprep.subr.mxu0 0.0
  %1028 = vmatpush1.msra.mxu0 0.0
  %1029 = vmatprep.mubr.f32.mxu0 0.0
  %1030 = vmatmul.mubr.f32.gmra.mrb[0].mxu0 %v954
  %v1031 = vpop.f32.mrb[0].mxu0
  %v1032 = vadd.f32 0.0, %v1031
  %v1033 = vpop.f32.mrb[0].mxu0
  %1034 = vmatprep.mubr.f32.mxu0 0.0
  %1035 = vmatmul.mubr.f32.gmra.mrb[0].mxu0 %v957
  %v1036 = vpop.f32.mrb[0].mxu0
  %v1037 = vadd.f32 0.0, %v1036
  %v1038 = vpop.f32.mrb[0].mxu0
  %1039 = vmatprep.mubr.f32.mxu0 0.0
  %1040 = vmatmul.mubr.f32.gmra.mrb[0].mxu0 %v960
  %v1041 = vpop.f32.mrb[0].mxu0
  %v1042 = vadd.f32 0.0, %v1041
  %v1043 = vpop.f32.mrb[0].mxu0
  %1044 = vmatprep.mubr.f32.mxu0 0.0
  %1045 = vmatmul.mubr.f32.gmra.mrb[0].mxu0 %v963
  %v1046 = vpop.f32.mrb[0].mxu0
  %v1047 = vadd.f32 0.0, %v1046
  %v1048 = vpop.f32.mrb[0].mxu0
  %1049 = vdwg.mxu0
  %v1050 = vadd.f32 %v927, %v1032
  %v1051 = vadd.f32 %v932, %v1037
  %v1052 = vadd.f32 %v937, %v1042
  %v1053 = vadd.f32 %v942, %v1047
  %v1054 = vld [vmem:[%s6 + $0xc0] sm:$0xff]
  %v1055 = vld [vmem:[%s6 + $0xc8] sm:$0xff]
  %v1056 = vld [vmem:[%s6 + $0xd0] sm:$0xff]
  %v1057 = vld [vmem:[%s6 + $0xd8] sm:$0xff]
  %v1058 = vld [vmem:[%s6 + $0xe0] sm:$0xff]
  %v1059 = vld [vmem:[%s6 + $0xe8] sm:$0xff]
  %v1060 = vld [vmem:[%s6 + $0xf0] sm:$0xff]
  %v1061 = vld [vmem:[%s6 + $0xf8] sm:$0xff]
  %v1063 = vsel %vm264, %v617, 0
  %v1066 = vsel %vm264, %v622, 0
  %v1069 = vsel %vm264, %v627, 0
  %v1072 = vsel %vm264, %v632, 0
  %1074 = vmatprep.subr.mxu0 0.0
  %1075 = vmatpush1.msra.mxu0 %v1054
  %1076 = vmatprep.subr.mxu0 0.0
  %1077 = vmatpush1.msra.mxu0 %v1055
  %1078 = vmatprep.subr.mxu0 0.0
  %1079 = vmatpush1.msra.mxu0 %v1056
  %1080 = vmatprep.subr.mxu0 0.0
  %1081 = vmatpush1.msra.mxu0 %v1057
  %1082 = vmatprep.subr.mxu0 0.0
  %1083 = vmatpush1.msra.mxu0 %v1058
  %1084 = vmatprep.subr.mxu0 0.0
  %1085 = vmatpush1.msra.mxu0 %v1059
  %1086 = vmatprep.subr.mxu0 0.0
  %1087 = vmatpush1.msra.mxu0 %v1060
  %1088 = vmatprep.subr.mxu0 0.0
  %1089 = vmatpush1.msra.mxu0 %v1061
  %1090 = vmatprep.subr.mxu0 0.0
  %1091 = vmatpush1.msra.mxu0 0.0
  %1092 = vmatprep.subr.mxu0 0.0
  %1093 = vmatpush1.msra.mxu0 0.0
  %1094 = vmatprep.subr.mxu0 0.0
  %1095 = vmatpush1.msra.mxu0 0.0
  %1096 = vmatprep.subr.mxu0 0.0
  %1097 = vmatpush1.msra.mxu0 0.0
  %1098 = vmatprep.subr.mxu0 0.0
  %1099 = vmatpush1.msra.mxu0 0.0
  %1100 = vmatprep.subr.mxu0 0.0
  %1101 = vmatpush1.msra.mxu0 0.0
  %1102 = vmatprep.subr.mxu0 0.0
  %1103 = vmatpush1.msra.mxu0 0.0
  %1104 = vmatprep.subr.mxu0 0.0
  %1105 = vmatpush1.msra.mxu0 0.0
  %1106 = vmatprep.subr.mxu0 0.0
  %1107 = vmatpush1.msra.mxu0 0.0
  %1108 = vmatprep.subr.mxu0 0.0
  %1109 = vmatpush1.msra.mxu0 0.0
  %1110 = vmatprep.subr.mxu0 0.0
  %1111 = vmatpush1.msra.mxu0 0.0
  %1112 = vmatprep.subr.mxu0 0.0
  %1113 = vmatpush1.msra.mxu0 0.0
  %1114 = vmatprep.subr.mxu0 0.0
  %1115 = vmatpush1.msra.mxu0 0.0
  %1116 = vmatprep.subr.mxu0 0.0
  %1117 = vmatpush1.msra.mxu0 0.0
  %1118 = vmatprep.subr.mxu0 0.0
  %1119 = vmatpush1.msra.mxu0 0.0
  %1120 = vmatprep.subr.mxu0 0.0
  %1121 = vmatpush1.msra.mxu0 0.0
  %1122 = vmatprep.subr.mxu0 0.0
  %1123 = vmatpush1.msra.mxu0 0.0
  %1124 = vmatprep.subr.mxu0 0.0
  %1125 = vmatpush1.msra.mxu0 0.0
  %1126 = vmatprep.subr.mxu0 0.0
  %1127 = vmatpush1.msra.mxu0 0.0
  %1128 = vmatprep.subr.mxu0 0.0
  %1129 = vmatpush1.msra.mxu0 0.0
  %1130 = vmatprep.subr.mxu0 0.0
  %1131 = vmatpush1.msra.mxu0 0.0
  %1132 = vmatprep.subr.mxu0 0.0
  %1133 = vmatpush1.msra.mxu0 0.0
  %1134 = vmatprep.subr.mxu0 0.0
  %1135 = vmatpush1.msra.mxu0 0.0
  %1136 = vmatprep.subr.mxu0 0.0
  %1137 = vmatpush1.msra.mxu0 0.0
  %1138 = vmatprep.mubr.f32.mxu0 0.0
  %1139 = vmatmul.mubr.f32.gmra.mrb[0].mxu0 %v1063
  %v1140 = vpop.f32.mrb[0].mxu0
  %v1141 = vadd.f32 0.0, %v1140
  %v1142 = vpop.f32.mrb[0].mxu0
  %1143 = vmatprep.mubr.f32.mxu0 0.0
  %1144 = vmatmul.mubr.f32.gmra.mrb[0].mxu0 %v1066
  %v1145 = vpop.f32.mrb[0].mxu0
  %v1146 = vadd.f32 0.0, %v1145
  %v1147 = vpop.f32.mrb[0].mxu0
  %1148 = vmatprep.mubr.f32.mxu0 0.0
  %1149 = vmatmul.mubr.f32.gmra.mrb[0].mxu0 %v1069
  %v1150 = vpop.f32.mrb[0].mxu0
  %v1151 = vadd.f32 0.0, %v1150
  %v1152 = vpop.f32.mrb[0].mxu0
  %1153 = vmatprep.mubr.f32.mxu0 0.0
  %1154 = vmatmul.mubr.f32.gmra.mrb[0].mxu0 %v1072
  %v1155 = vpop.f32.mrb[0].mxu0
  %v1156 = vadd.f32 0.0, %v1155
  %v1157 = vpop.f32.mrb[0].mxu0
  %1158 = vdwg.mxu0
  %v1159 = vadd.f32 %v1050, %v1141
  %v1160 = vadd.f32 %v1051, %v1146
  %v1161 = vadd.f32 %v1052, %v1151
  %v1162 = vadd.f32 %v1053, %v1156
  %v1163 = vld [vmem:[%s6 + $0x100] sm:$0xff]
  %v1164 = vld [vmem:[%s6 + $0x108] sm:$0xff]
  %v1165 = vld [vmem:[%s6 + $0x110] sm:$0xff]
  %v1166 = vld [vmem:[%s6 + $0x118] sm:$0xff]
  %v1167 = vld [vmem:[%s6 + $0x120] sm:$0xff]
  %v1168 = vld [vmem:[%s6 + $0x128] sm:$0xff]
  %v1169 = vld [vmem:[%s6 + $0x130] sm:$0xff]
  %v1170 = vld [vmem:[%s6 + $0x138] sm:$0xff]
  %v1172 = vsel %vm264, %v637, 0
  %v1175 = vsel %vm264, %v642, 0
  %v1178 = vsel %vm264, %v647, 0
  %v1181 = vsel %vm264, %v652, 0
  %1183 = vmatprep.subr.mxu0 0.0
  %1184 = vmatpush1.msra.mxu0 %v1163
  %1185 = vmatprep.subr.mxu0 0.0
  %1186 = vmatpush1.msra.mxu0 %v1164
  %1187 = vmatprep.subr.mxu0 0.0
  %1188 = vmatpush1.msra.mxu0 %v1165
  %1189 = vmatprep.subr.mxu0 0.0
  %1190 = vmatpush1.msra.mxu0 %v1166
  %1191 = vmatprep.subr.mxu0 0.0
  %1192 = vmatpush1.msra.mxu0 %v1167
  %1193 = vmatprep.subr.mxu0 0.0
  %1194 = vmatpush1.msra.mxu0 %v1168
  %1195 = vmatprep.subr.mxu0 0.0
  %1196 = vmatpush1.msra.mxu0 %v1169
  %1197 = vmatprep.subr.mxu0 0.0
  %1198 = vmatpush1.msra.mxu0 %v1170
  %1199 = vmatprep.subr.mxu0 0.0
  %1200 = vmatpush1.msra.mxu0 0.0
  %1201 = vmatprep.subr.mxu0 0.0
  %1202 = vmatpush1.msra.mxu0 0.0
  %1203 = vmatprep.subr.mxu0 0.0
  %1204 = vmatpush1.msra.mxu0 0.0
  %1205 = vmatprep.subr.mxu0 0.0
  %1206 = vmatpush1.msra.mxu0 0.0
  %1207 = vmatprep.subr.mxu0 0.0
  %1208 = vmatpush1.msra.mxu0 0.0
  %1209 = vmatprep.subr.mxu0 0.0
  %1210 = vmatpush1.msra.mxu0 0.0
  %1211 = vmatprep.subr.mxu0 0.0
  %1212 = vmatpush1.msra.mxu0 0.0
  %1213 = vmatprep.subr.mxu0 0.0
  %1214 = vmatpush1.msra.mxu0 0.0
  %1215 = vmatprep.subr.mxu0 0.0
  %1216 = vmatpush1.msra.mxu0 0.0
  %1217 = vmatprep.subr.mxu0 0.0
  %1218 = vmatpush1.msra.mxu0 0.0
  %1219 = vmatprep.subr.mxu0 0.0
  %1220 = vmatpush1.msra.mxu0 0.0
  %1221 = vmatprep.subr.mxu0 0.0
  %1222 = vmatpush1.msra.mxu0 0.0
  %1223 = vmatprep.subr.mxu0 0.0
  %1224 = vmatpush1.msra.mxu0 0.0
  %1225 = vmatprep.subr.mxu0 0.0
  %1226 = vmatpush1.msra.mxu0 0.0
  %1227 = vmatprep.subr.mxu0 0.0
  %1228 = vmatpush1.msra.mxu0 0.0
  %1229 = vmatprep.subr.mxu0 0.0
  %1230 = vmatpush1.msra.mxu0 0.0
  %1231 = vmatprep.subr.mxu0 0.0
  %1232 = vmatpush1.msra.mxu0 0.0
  %1233 = vmatprep.subr.mxu0 0.0
  %1234 = vmatpush1.msra.mxu0 0.0
  %1235 = vmatprep.subr.mxu0 0.0
  %1236 = vmatpush1.msra.mxu0 0.0
  %1237 = vmatprep.subr.mxu0 0.0
  %1238 = vmatpush1.msra.mxu0 0.0
  %1239 = vmatprep.subr.mxu0 0.0
  %1240 = vmatpush1.msra.mxu0 0.0
  %1241 = vmatprep.subr.mxu0 0.0
  %1242 = vmatpush1.msra.mxu0 0.0
  %1243 = vmatprep.subr.mxu0 0.0
  %1244 = vmatpush1.msra.mxu0 0.0
  %1245 = vmatprep.subr.mxu0 0.0
  %1246 = vmatpush1.msra.mxu0 0.0
  %1247 = vmatprep.mubr.f32.mxu0 0.0
  %1248 = vmatmul.mubr.f32.gmra.mrb[0].mxu0 %v1172
  %v1249 = vpop.f32.mrb[0].mxu0
  %v1250 = vadd.f32 0.0, %v1249
  %v1251 = vpop.f32.mrb[0].mxu0
  %1252 = vmatprep.mubr.f32.mxu0 0.0
  %1253 = vmatmul.mubr.f32.gmra.mrb[0].mxu0 %v1175
  %v1254 = vpop.f32.mrb[0].mxu0
  %v1255 = vadd.f32 0.0, %v1254
  %v1256 = vpop.f32.mrb[0].mxu0
  %1257 = vmatprep.mubr.f32.mxu0 0.0
  %1258 = vmatmul.mubr.f32.gmra.mrb[0].mxu0 %v1178
  %v1259 = vpop.f32.mrb[0].mxu0
  %v1260 = vadd.f32 0.0, %v1259
  %v1261 = vpop.f32.mrb[0].mxu0
  %1262 = vmatprep.mubr.f32.mxu0 0.0
  %1263 = vmatmul.mubr.f32.gmra.mrb[0].mxu0 %v1181
  %v1264 = vpop.f32.mrb[0].mxu0
  %v1265 = vadd.f32 0.0, %v1264
  %v1266 = vpop.f32.mrb[0].mxu0
  %1267 = vdwg.mxu0
  %v1268 = vadd.f32 %v1159, %v1250
  %v1269 = vadd.f32 %v1160, %v1255
  %v1270 = vadd.f32 %v1161, %v1260
  %v1271 = vadd.f32 %v1162, %v1265
  %v1272 = vld [vmem:[%s6 + $0x140] sm:$0xff]
  %v1273 = vld [vmem:[%s6 + $0x148] sm:$0xff]
  %v1274 = vld [vmem:[%s6 + $0x150] sm:$0xff]
  %v1275 = vld [vmem:[%s6 + $0x158] sm:$0xff]
  %v1276 = vld [vmem:[%s6 + $0x160] sm:$0xff]
  %v1277 = vld [vmem:[%s6 + $0x168] sm:$0xff]
  %v1278 = vld [vmem:[%s6 + $0x170] sm:$0xff]
  %v1279 = vld [vmem:[%s6 + $0x178] sm:$0xff]
  %v1281 = vsel %vm264, %v657, 0
  %v1284 = vsel %vm264, %v662, 0
  %v1287 = vsel %vm264, %v667, 0
  %v1290 = vsel %vm264, %v672, 0
  %1292 = vmatprep.subr.mxu0 0.0
  %1293 = vmatpush1.msra.mxu0 %v1272
  %1294 = vmatprep.subr.mxu0 0.0
  %1295 = vmatpush1.msra.mxu0 %v1273
  %1296 = vmatprep.subr.mxu0 0.0
  %1297 = vmatpush1.msra.mxu0 %v1274
  %1298 = vmatprep.subr.mxu0 0.0
  %1299 = vmatpush1.msra.mxu0 %v1275
  %1300 = vmatprep.subr.mxu0 0.0
  %1301 = vmatpush1.msra.mxu0 %v1276
  %1302 = vmatprep.subr.mxu0 0.0
  %1303 = vmatpush1.msra.mxu0 %v1277
  %1304 = vmatprep.subr.mxu0 0.0
  %1305 = vmatpush1.msra.mxu0 %v1278
  %1306 = vmatprep.subr.mxu0 0.0
  %1307 = vmatpush1.msra.mxu0 %v1279
  %1308 = vmatprep.subr.mxu0 0.0
  %1309 = vmatpush1.msra.mxu0 0.0
  %1310 = vmatprep.subr.mxu0 0.0
  %1311 = vmatpush1.msra.mxu0 0.0
  %1312 = vmatprep.subr.mxu0 0.0
  %1313 = vmatpush1.msra.mxu0 0.0
  %1314 = vmatprep.subr.mxu0 0.0
  %1315 = vmatpush1.msra.mxu0 0.0
  %1316 = vmatprep.subr.mxu0 0.0
  %1317 = vmatpush1.msra.mxu0 0.0
  %1318 = vmatprep.subr.mxu0 0.0
  %1319 = vmatpush1.msra.mxu0 0.0
  %1320 = vmatprep.subr.mxu0 0.0
  %1321 = vmatpush1.msra.mxu0 0.0
  %1322 = vmatprep.subr.mxu0 0.0
  %1323 = vmatpush1.msra.mxu0 0.0
  %1324 = vmatprep.subr.mxu0 0.0
  %1325 = vmatpush1.msra.mxu0 0.0
  %1326 = vmatprep.subr.mxu0 0.0
  %1327 = vmatpush1.msra.mxu0 0.0
  %1328 = vmatprep.subr.mxu0 0.0
  %1329 = vmatpush1.msra.mxu0 0.0
  %1330 = vmatprep.subr.mxu0 0.0
  %1331 = vmatpush1.msra.mxu0 0.0
  %1332 = vmatprep.subr.mxu0 0.0
  %1333 = vmatpush1.msra.mxu0 0.0
  %1334 = vmatprep.subr.mxu0 0.0
  %1335 = vmatpush1.msra.mxu0 0.0
  %1336 = vmatprep.subr.mxu0 0.0
  %1337 = vmatpush1.msra.mxu0 0.0
  %1338 = vmatprep.subr.mxu0 0.0
  %1339 = vmatpush1.msra.mxu0 0.0
  %1340 = vmatprep.subr.mxu0 0.0
  %1341 = vmatpush1.msra.mxu0 0.0
  %1342 = vmatprep.subr.mxu0 0.0
  %1343 = vmatpush1.msra.mxu0 0.0
  %1344 = vmatprep.subr.mxu0 0.0
  %1345 = vmatpush1.msra.mxu0 0.0
  %1346 = vmatprep.subr.mxu0 0.0
  %1347 = vmatpush1.msra.mxu0 0.0
  %1348 = vmatprep.subr.mxu0 0.0
  %1349 = vmatpush1.msra.mxu0 0.0
  %1350 = vmatprep.subr.mxu0 0.0
  %1351 = vmatpush1.msra.mxu0 0.0
  %1352 = vmatprep.subr.mxu0 0.0
  %1353 = vmatpush1.msra.mxu0 0.0
  %1354 = vmatprep.subr.mxu0 0.0
  %1355 = vmatpush1.msra.mxu0 0.0
  %1356 = vmatprep.mubr.f32.mxu0 0.0
  %1357 = vmatmul.mubr.f32.gmra.mrb[0].mxu0 %v1281
  %v1358 = vpop.f32.mrb[0].mxu0
  %v1359 = vadd.f32 0.0, %v1358
  %v1360 = vpop.f32.mrb[0].mxu0
  %1361 = vmatprep.mubr.f32.mxu0 0.0
  %1362 = vmatmul.mubr.f32.gmra.mrb[0].mxu0 %v1284
  %v1363 = vpop.f32.mrb[0].mxu0
  %v1364 = vadd.f32 0.0, %v1363
  %v1365 = vpop.f32.mrb[0].mxu0
  %1366 = vmatprep.mubr.f32.mxu0 0.0
  %1367 = vmatmul.mubr.f32.gmra.mrb[0].mxu0 %v1287
  %v1368 = vpop.f32.mrb[0].mxu0
  %v1369 = vadd.f32 0.0, %v1368
  %v1370 = vpop.f32.mrb[0].mxu0
  %1371 = vmatprep.mubr.f32.mxu0 0.0
  %1372 = vmatmul.mubr.f32.gmra.mrb[0].mxu0 %v1290
  %v1373 = vpop.f32.mrb[0].mxu0
  %v1374 = vadd.f32 0.0, %v1373
  %v1375 = vpop.f32.mrb[0].mxu0
  %1376 = vdwg.mxu0
  %v1377 = vadd.f32 %v1268, %v1359
  %v1378 = vadd.f32 %v1269, %v1364
  %v1379 = vadd.f32 %v1270, %v1369
  %v1380 = vadd.f32 %v1271, %v1374
  %v1381 = vld [vmem:[%s6 + $0x180] sm:$0xff]
  %v1382 = vld [vmem:[%s6 + $0x188] sm:$0xff]
  %v1383 = vld [vmem:[%s6 + $0x190] sm:$0xff]
  %v1384 = vld [vmem:[%s6 + $0x198] sm:$0xff]
  %v1385 = vld [vmem:[%s6 + $0x1a0] sm:$0xff]
  %v1386 = vld [vmem:[%s6 + $0x1a8] sm:$0xff]
  %v1387 = vld [vmem:[%s6 + $0x1b0] sm:$0xff]
  %v1388 = vld [vmem:[%s6 + $0x1b8] sm:$0xff]
  %v1390 = vsel %vm264, %v677, 0
  %v1393 = vsel %vm264, %v682, 0
  %v1396 = vsel %vm264, %v687, 0
  %v1399 = vsel %vm264, %v692, 0
  %1401 = vmatprep.subr.mxu0 0.0
  %1402 = vmatpush1.msra.mxu0 %v1381
  %1403 = vmatprep.subr.mxu0 0.0
  %1404 = vmatpush1.msra.mxu0 %v1382
  %1405 = vmatprep.subr.mxu0 0.0
  %1406 = vmatpush1.msra.mxu0 %v1383
  %1407 = vmatprep.subr.mxu0 0.0
  %1408 = vmatpush1.msra.mxu0 %v1384
  %1409 = vmatprep.subr.mxu0 0.0
  %1410 = vmatpush1.msra.mxu0 %v1385
  %1411 = vmatprep.subr.mxu0 0.0
  %1412 = vmatpush1.msra.mxu0 %v1386
  %1413 = vmatprep.subr.mxu0 0.0
  %1414 = vmatpush1.msra.mxu0 %v1387
  %1415 = vmatprep.subr.mxu0 0.0
  %1416 = vmatpush1.msra.mxu0 %v1388
  %1417 = vmatprep.subr.mxu0 0.0
  %1418 = vmatpush1.msra.mxu0 0.0
  %1419 = vmatprep.subr.mxu0 0.0
  %1420 = vmatpush1.msra.mxu0 0.0
  %1421 = vmatprep.subr.mxu0 0.0
  %1422 = vmatpush1.msra.mxu0 0.0
  %1423 = vmatprep.subr.mxu0 0.0
  %1424 = vmatpush1.msra.mxu0 0.0
  %1425 = vmatprep.subr.mxu0 0.0
  %1426 = vmatpush1.msra.mxu0 0.0
  %1427 = vmatprep.subr.mxu0 0.0
  %1428 = vmatpush1.msra.mxu0 0.0
  %1429 = vmatprep.subr.mxu0 0.0
  %1430 = vmatpush1.msra.mxu0 0.0
  %1431 = vmatprep.subr.mxu0 0.0
  %1432 = vmatpush1.msra.mxu0 0.0
  %1433 = vmatprep.subr.mxu0 0.0
  %1434 = vmatpush1.msra.mxu0 0.0
  %1435 = vmatprep.subr.mxu0 0.0
  %1436 = vmatpush1.msra.mxu0 0.0
  %1437 = vmatprep.subr.mxu0 0.0
  %1438 = vmatpush1.msra.mxu0 0.0
  %1439 = vmatprep.subr.mxu0 0.0
  %1440 = vmatpush1.msra.mxu0 0.0
  %1441 = vmatprep.subr.mxu0 0.0
  %1442 = vmatpush1.msra.mxu0 0.0
  %1443 = vmatprep.subr.mxu0 0.0
  %1444 = vmatpush1.msra.mxu0 0.0
  %1445 = vmatprep.subr.mxu0 0.0
  %1446 = vmatpush1.msra.mxu0 0.0
  %1447 = vmatprep.subr.mxu0 0.0
  %1448 = vmatpush1.msra.mxu0 0.0
  %1449 = vmatprep.subr.mxu0 0.0
  %1450 = vmatpush1.msra.mxu0 0.0
  %1451 = vmatprep.subr.mxu0 0.0
  %1452 = vmatpush1.msra.mxu0 0.0
  %1453 = vmatprep.subr.mxu0 0.0
  %1454 = vmatpush1.msra.mxu0 0.0
  %1455 = vmatprep.subr.mxu0 0.0
  %1456 = vmatpush1.msra.mxu0 0.0
  %1457 = vmatprep.subr.mxu0 0.0
  %1458 = vmatpush1.msra.mxu0 0.0
  %1459 = vmatprep.subr.mxu0 0.0
  %1460 = vmatpush1.msra.mxu0 0.0
  %1461 = vmatprep.subr.mxu0 0.0
  %1462 = vmatpush1.msra.mxu0 0.0
  %1463 = vmatprep.subr.mxu0 0.0
  %1464 = vmatpush1.msra.mxu0 0.0
  %1465 = vmatprep.mubr.f32.mxu0 0.0
  %1466 = vmatmul.mubr.f32.gmra.mrb[0].mxu0 %v1390
  %v1467 = vpop.f32.mrb[0].mxu0
  %v1468 = vadd.f32 0.0, %v1467
  %v1469 = vpop.f32.mrb[0].mxu0
  %1470 = vmatprep.mubr.f32.mxu0 0.0
  %1471 = vmatmul.mubr.f32.gmra.mrb[0].mxu0 %v1393
  %v1472 = vpop.f32.mrb[0].mxu0
  %v1473 = vadd.f32 0.0, %v1472
  %v1474 = vpop.f32.mrb[0].mxu0
  %1475 = vmatprep.mubr.f32.mxu0 0.0
  %1476 = vmatmul.mubr.f32.gmra.mrb[0].mxu0 %v1396
  %v1477 = vpop.f32.mrb[0].mxu0
  %v1478 = vadd.f32 0.0, %v1477
  %v1479 = vpop.f32.mrb[0].mxu0
  %1480 = vmatprep.mubr.f32.mxu0 0.0
  %1481 = vmatmul.mubr.f32.gmra.mrb[0].mxu0 %v1399
  %v1482 = vpop.f32.mrb[0].mxu0
  %v1483 = vadd.f32 0.0, %v1482
  %v1484 = vpop.f32.mrb[0].mxu0
  %1485 = vdwg.mxu0
  %v1486 = vadd.f32 %v1377, %v1468
  %v1487 = vadd.f32 %v1378, %v1473
  %v1488 = vadd.f32 %v1379, %v1478
  %v1489 = vadd.f32 %v1380, %v1483
  %v1490 = vld [vmem:[%s6 + $0x1c0] sm:$0xff]
  %v1491 = vld [vmem:[%s6 + $0x1c8] sm:$0xff]
  %v1492 = vld [vmem:[%s6 + $0x1d0] sm:$0xff]
  %v1493 = vld [vmem:[%s6 + $0x1d8] sm:$0xff]
  %v1494 = vld [vmem:[%s6 + $0x1e0] sm:$0xff]
  %v1495 = vld [vmem:[%s6 + $0x1e8] sm:$0xff]
  %v1496 = vld [vmem:[%s6 + $0x1f0] sm:$0xff]
  %v1497 = vld [vmem:[%s6 + $0x1f8] sm:$0xff]
  %v1499 = vsel %vm264, %v697, 0
  %v1502 = vsel %vm264, %v702, 0
  %v1505 = vsel %vm264, %v707, 0
  %v1508 = vsel %vm264, %v712, 0
  %1510 = vmatprep.subr.mxu0 0.0
  %1511 = vmatpush1.msra.mxu0 %v1490
  %1512 = vmatprep.subr.mxu0 0.0
  %1513 = vmatpush1.msra.mxu0 %v1491
  %1514 = vmatprep.subr.mxu0 0.0
  %1515 = vmatpush1.msra.mxu0 %v1492
  %1516 = vmatprep.subr.mxu0 0.0
  %1517 = vmatpush1.msra.mxu0 %v1493
  %1518 = vmatprep.subr.mxu0 0.0
  %1519 = vmatpush1.msra.mxu0 %v1494
  %1520 = vmatprep.subr.mxu0 0.0
  %1521 = vmatpush1.msra.mxu0 %v1495
  %1522 = vmatprep.subr.mxu0 0.0
  %1523 = vmatpush1.msra.mxu0 %v1496
  %1524 = vmatprep.subr.mxu0 0.0
  %1525 = vmatpush1.msra.mxu0 %v1497
  %1526 = vmatprep.subr.mxu0 0.0
  %1527 = vmatpush1.msra.mxu0 0.0
  %1528 = vmatprep.subr.mxu0 0.0
  %1529 = vmatpush1.msra.mxu0 0.0
  %1530 = vmatprep.subr.mxu0 0.0
  %1531 = vmatpush1.msra.mxu0 0.0
  %1532 = vmatprep.subr.mxu0 0.0
  %1533 = vmatpush1.msra.mxu0 0.0
  %1534 = vmatprep.subr.mxu0 0.0
  %1535 = vmatpush1.msra.mxu0 0.0
  %1536 = vmatprep.subr.mxu0 0.0
  %1537 = vmatpush1.msra.mxu0 0.0
  %1538 = vmatprep.subr.mxu0 0.0
  %1539 = vmatpush1.msra.mxu0 0.0
  %1540 = vmatprep.subr.mxu0 0.0
  %1541 = vmatpush1.msra.mxu0 0.0
  %1542 = vmatprep.subr.mxu0 0.0
  %1543 = vmatpush1.msra.mxu0 0.0
  %1544 = vmatprep.subr.mxu0 0.0
  %1545 = vmatpush1.msra.mxu0 0.0
  %1546 = vmatprep.subr.mxu0 0.0
  %1547 = vmatpush1.msra.mxu0 0.0
  %1548 = vmatprep.subr.mxu0 0.0
  %1549 = vmatpush1.msra.mxu0 0.0
  %1550 = vmatprep.subr.mxu0 0.0
  %1551 = vmatpush1.msra.mxu0 0.0
  %1552 = vmatprep.subr.mxu0 0.0
  %1553 = vmatpush1.msra.mxu0 0.0
  %1554 = vmatprep.subr.mxu0 0.0
  %1555 = vmatpush1.msra.mxu0 0.0
  %1556 = vmatprep.subr.mxu0 0.0
  %1557 = vmatpush1.msra.mxu0 0.0
  %1558 = vmatprep.subr.mxu0 0.0
  %1559 = vmatpush1.msra.mxu0 0.0
  %1560 = vmatprep.subr.mxu0 0.0
  %1561 = vmatpush1.msra.mxu0 0.0
  %1562 = vmatprep.subr.mxu0 0.0
  %1563 = vmatpush1.msra.mxu0 0.0
  %1564 = vmatprep.subr.mxu0 0.0
  %1565 = vmatpush1.msra.mxu0 0.0
  %1566 = vmatprep.subr.mxu0 0.0
  %1567 = vmatpush1.msra.mxu0 0.0
  %1568 = vmatprep.subr.mxu0 0.0
  %1569 = vmatpush1.msra.mxu0 0.0
  %1570 = vmatprep.subr.mxu0 0.0
  %1571 = vmatpush1.msra.mxu0 0.0
  %1572 = vmatprep.subr.mxu0 0.0
  %1573 = vmatpush1.msra.mxu0 0.0
  %1574 = vmatprep.mubr.f32.mxu0 0.0
  %1575 = vmatmul.mubr.f32.gmra.mrb[0].mxu0 %v1499
  %v1576 = vpop.f32.mrb[0].mxu0
  %v1577 = vadd.f32 0.0, %v1576
  %v1578 = vpop.f32.mrb[0].mxu0
  %1579 = vmatprep.mubr.f32.mxu0 0.0
  %1580 = vmatmul.mubr.f32.gmra.mrb[0].mxu0 %v1502
  %v1581 = vpop.f32.mrb[0].mxu0
  %v1582 = vadd.f32 0.0, %v1581
  %v1583 = vpop.f32.mrb[0].mxu0
  %1584 = vmatprep.mubr.f32.mxu0 0.0
  %1585 = vmatmul.mubr.f32.gmra.mrb[0].mxu0 %v1505
  %v1586 = vpop.f32.mrb[0].mxu0
  %v1587 = vadd.f32 0.0, %v1586
  %v1588 = vpop.f32.mrb[0].mxu0
  %1589 = vmatprep.mubr.f32.mxu0 0.0
  %1590 = vmatmul.mubr.f32.gmra.mrb[0].mxu0 %v1508
  %v1591 = vpop.f32.mrb[0].mxu0
  %v1592 = vadd.f32 0.0, %v1591
  %v1593 = vpop.f32.mrb[0].mxu0
  %1594 = vdwg.mxu0
  %v1595 = vadd.f32 %v1486, %v1577
  %v1596 = vadd.f32 %v1487, %v1582
  %v1597 = vadd.f32 %v1488, %v1587
  %v1598 = vadd.f32 %v1489, %v1592
  %v1599 = vld [vmem:[%s6 + $0x200] sm:$0xff]
  %v1600 = vld [vmem:[%s6 + $0x208] sm:$0xff]
  %v1601 = vld [vmem:[%s6 + $0x210] sm:$0xff]
  %v1602 = vld [vmem:[%s6 + $0x218] sm:$0xff]
  %v1603 = vld [vmem:[%s6 + $0x220] sm:$0xff]
  %v1604 = vld [vmem:[%s6 + $0x228] sm:$0xff]
  %v1605 = vld [vmem:[%s6 + $0x230] sm:$0xff]
  %v1606 = vld [vmem:[%s6 + $0x238] sm:$0xff]
  %v1608 = vsel %vm264, %v717, 0
  %v1611 = vsel %vm264, %v722, 0
  %v1614 = vsel %vm264, %v727, 0
  %v1617 = vsel %vm264, %v732, 0
  %1619 = vmatprep.subr.mxu0 0.0
  %1620 = vmatpush1.msra.mxu0 %v1599
  %1621 = vmatprep.subr.mxu0 0.0
  %1622 = vmatpush1.msra.mxu0 %v1600
  %1623 = vmatprep.subr.mxu0 0.0
  %1624 = vmatpush1.msra.mxu0 %v1601
  %1625 = vmatprep.subr.mxu0 0.0
  %1626 = vmatpush1.msra.mxu0 %v1602
  %1627 = vmatprep.subr.mxu0 0.0
  %1628 = vmatpush1.msra.mxu0 %v1603
  %1629 = vmatprep.subr.mxu0 0.0
  %1630 = vmatpush1.msra.mxu0 %v1604
  %1631 = vmatprep.subr.mxu0 0.0
  %1632 = vmatpush1.msra.mxu0 %v1605
  %1633 = vmatprep.subr.mxu0 0.0
  %1634 = vmatpush1.msra.mxu0 %v1606
  %1635 = vmatprep.subr.mxu0 0.0
  %1636 = vmatpush1.msra.mxu0 0.0
  %1637 = vmatprep.subr.mxu0 0.0
  %1638 = vmatpush1.msra.mxu0 0.0
  %1639 = vmatprep.subr.mxu0 0.0
  %1640 = vmatpush1.msra.mxu0 0.0
  %1641 = vmatprep.subr.mxu0 0.0
  %1642 = vmatpush1.msra.mxu0 0.0
  %1643 = vmatprep.subr.mxu0 0.0
  %1644 = vmatpush1.msra.mxu0 0.0
  %1645 = vmatprep.subr.mxu0 0.0
  %1646 = vmatpush1.msra.mxu0 0.0
  %1647 = vmatprep.subr.mxu0 0.0
  %1648 = vmatpush1.msra.mxu0 0.0
  %1649 = vmatprep.subr.mxu0 0.0
  %1650 = vmatpush1.msra.mxu0 0.0
  %1651 = vmatprep.subr.mxu0 0.0
  %1652 = vmatpush1.msra.mxu0 0.0
  %1653 = vmatprep.subr.mxu0 0.0
  %1654 = vmatpush1.msra.mxu0 0.0
  %1655 = vmatprep.subr.mxu0 0.0
  %1656 = vmatpush1.msra.mxu0 0.0
  %1657 = vmatprep.subr.mxu0 0.0
  %1658 = vmatpush1.msra.mxu0 0.0
  %1659 = vmatprep.subr.mxu0 0.0
  %1660 = vmatpush1.msra.mxu0 0.0
  %1661 = vmatprep.subr.mxu0 0.0
  %1662 = vmatpush1.msra.mxu0 0.0
  %1663 = vmatprep.subr.mxu0 0.0
  %1664 = vmatpush1.msra.mxu0 0.0
  %1665 = vmatprep.subr.mxu0 0.0
  %1666 = vmatpush1.msra.mxu0 0.0
  %1667 = vmatprep.subr.mxu0 0.0
  %1668 = vmatpush1.msra.mxu0 0.0
  %1669 = vmatprep.subr.mxu0 0.0
  %1670 = vmatpush1.msra.mxu0 0.0
  %1671 = vmatprep.subr.mxu0 0.0
  %1672 = vmatpush1.msra.mxu0 0.0
  %1673 = vmatprep.subr.mxu0 0.0
  %1674 = vmatpush1.msra.mxu0 0.0
  %1675 = vmatprep.subr.mxu0 0.0
  %1676 = vmatpush1.msra.mxu0 0.0
  %1677 = vmatprep.subr.mxu0 0.0
  %1678 = vmatpush1.msra.mxu0 0.0
  %1679 = vmatprep.subr.mxu0 0.0
  %1680 = vmatpush1.msra.mxu0 0.0
  %1681 = vmatprep.subr.mxu0 0.0
  %1682 = vmatpush1.msra.mxu0 0.0
  %1683 = vmatprep.mubr.f32.mxu0 0.0
  %1684 = vmatmul.mubr.f32.gmra.mrb[0].mxu0 %v1608
  %v1685 = vpop.f32.mrb[0].mxu0
  %v1686 = vadd.f32 0.0, %v1685
  %v1687 = vpop.f32.mrb[0].mxu0
  %1688 = vmatprep.mubr.f32.mxu0 0.0
  %1689 = vmatmul.mubr.f32.gmra.mrb[0].mxu0 %v1611
  %v1690 = vpop.f32.mrb[0].mxu0
  %v1691 = vadd.f32 0.0, %v1690
  %v1692 = vpop.f32.mrb[0].mxu0
  %1693 = vmatprep.mubr.f32.mxu0 0.0
  %1694 = vmatmul.mubr.f32.gmra.mrb[0].mxu0 %v1614
  %v1695 = vpop.f32.mrb[0].mxu0
  %v1696 = vadd.f32 0.0, %v1695
  %v1697 = vpop.f32.mrb[0].mxu0
  %1698 = vmatprep.mubr.f32.mxu0 0.0
  %1699 = vmatmul.mubr.f32.gmra.mrb[0].mxu0 %v1617
  %v1700 = vpop.f32.mrb[0].mxu0
  %v1701 = vadd.f32 0.0, %v1700
  %v1702 = vpop.f32.mrb[0].mxu0
  %1703 = vdwg.mxu0
  %v1704 = vadd.f32 %v1595, %v1686
  %v1705 = vadd.f32 %v1596, %v1691
  %v1706 = vadd.f32 %v1597, %v1696
  %v1707 = vadd.f32 %v1598, %v1701
  %v1708 = vld [vmem:[%s7] sm:$0x1]
  %v1710 = vlaneseq
  %v1711 = vshrl.u32 %v1710, 7
  %v1712 = vsub.s32 0, %v1711
  %v1713 = vrot.slane %v1708, %v1712
  %v1715 = vadd.f32 %v1704, %v1713
  %v1716 = vadd.f32 %v1705, %v1713
  %v1717 = vadd.f32 %v1706, %v1713
  %v1718 = vadd.f32 %v1707, %v1713
  %v1719 = vsel %vm264, %v1715, 0.0
  %v1720 = vsel %vm264, %v1716, 0.0
  %v1721 = vadd.f32 %v1719, %v1720
  %v1722 = vsel %vm264, %v1717, 0.0
  %v1723 = vadd.f32 %v1721, %v1722
  %v1724 = vsel %vm264, %v1718, 0.0
  %v1725 = vadd.f32 %v1723, %v1724
  %v1726 = vrot.slane %v1725, 4
  %v1727 = vadd.f32 %v1725, %v1726
  %v1728 = vrot.slane %v1727, 2
  %v1729 = vadd.f32 %v1727, %v1728
  %v1730 = vrot.slane %v1729, 1
  %v1731 = vadd.f32 %v1729, %v1730
  %v1732 = vrcp.pop 32.0
  %v1733 = vmul.f32 %v1731, %v1732
  %v1734 = vsub.f32 %v1715, %v1733
  %v1735 = vsub.f32 %v1716, %v1733
  %v1736 = vsub.f32 %v1717, %v1733
  %v1737 = vsub.f32 %v1718, %v1733
  %v1738 = vmul.f32 %v1734, %v1734
  %v1739 = vmul.f32 %v1735, %v1735
  %v1740 = vmul.f32 %v1736, %v1736
  %v1741 = vmul.f32 %v1737, %v1737
  %v1742 = vsel %vm264, %v1738, 0.0
  %v1743 = vsel %vm264, %v1739, 0.0
  %v1744 = vadd.f32 %v1742, %v1743
  %v1745 = vsel %vm264, %v1740, 0.0
  %v1746 = vadd.f32 %v1744, %v1745
  %v1747 = vsel %vm264, %v1741, 0.0
  %v1748 = vadd.f32 %v1746, %v1747
  %v1749 = vrot.slane %v1748, 4
  %v1750 = vadd.f32 %v1748, %v1749
  %v1751 = vrot.slane %v1750, 2
  %v1752 = vadd.f32 %v1750, %v1751
  %v1753 = vrot.slane %v1752, 1
  %v1754 = vadd.f32 %v1752, %v1753
  %v1755 = vmul.f32 %v1754, %v1732
  %v1756 = vadd.f32 %v1755, 1e-05
  %v1757 = vrsqrt.pop %v1756
  %v1758 = vmul.f32 %v1734, %v1757
  %v1759 = vmul.f32 %v1735, %v1757
  %v1760 = vmul.f32 %v1736, %v1757
  %v1761 = vmul.f32 %v1737, %v1757
  %v1762 = vld [vmem:[%s8] sm:$0x1]
  %v1764 = vlaneseq
  %v1765 = vshrl.u32 %v1764, 7
  %v1766 = vsub.s32 0, %v1765
  %v1767 = vrot.slane %v1762, %v1766
  %v1769 = vmul.f32 %v1758, %v1767
  %v1770 = vmul.f32 %v1759, %v1767
  %v1771 = vmul.f32 %v1760, %v1767
  %v1772 = vmul.f32 %v1761, %v1767
  %v1773 = vld [vmem:[%s9] sm:$0x1]
  %v1775 = vlaneseq
  %v1776 = vshrl.u32 %v1775, 7
  %v1777 = vsub.s32 0, %v1776
  %v1778 = vrot.slane %v1773, %v1777
  %v1780 = vadd.f32 %v1769, %v1778
  %v1781 = vadd.f32 %v1770, %v1778
  %v1782 = vadd.f32 %v1771, %v1778
  %v1783 = vadd.f32 %v1772, %v1778
  %v1784 = vmax.f32 %v1780, 0.0
  %v1785 = vmax.f32 %v1781, 0.0
  %v1786 = vmax.f32 %v1782, 0.0
  %v1787 = vmax.f32 %v1783, 0.0
  %v1788 = vld [vmem:[%s11] sm:$0x1]
  %v1789 = vld [vmem:[%s10] sm:$0xff]
  %v1790 = vld [vmem:[%s10 + $0x8] sm:$0xff]
  %v1791 = vld [vmem:[%s10 + $0x10] sm:$0xff]
  %v1792 = vld [vmem:[%s10 + $0x18] sm:$0xff]
  %v1793 = vld [vmem:[%s10 + $0x20] sm:$0xff]
  %v1794 = vld [vmem:[%s10 + $0x28] sm:$0xff]
  %v1795 = vld [vmem:[%s10 + $0x30] sm:$0xff]
  %v1796 = vld [vmem:[%s10 + $0x38] sm:$0xff]
  %v1798 = vlaneseq
  %v1799 = vshrl.u32 %v1798, 7
  %v1800 = vsub.s32 0, %v1799
  %v1801 = vrot.slane %v1788, %v1800
  %1802 = vset.pattern.permute.xlu0 0
  %1803 = vperm.xlu0 %1802, %v1801
  %v1804 = vpop.permute.xlu0 %1803
  %v1807 = vsel %vm264, %v1784, 0
  %v1810 = vsel %vm264, %v1785, 0
  %v1813 = vsel %vm264, %v1786, 0
  %v1816 = vsel %vm264, %v1787, 0
  %1818 = vmatprep.subr.mxu0 0.0
  %1819 = vmatpush1.msra.mxu0 %v1789
  %1820 = vmatprep.subr.mxu0 0.0
  %1821 = vmatpush1.msra.mxu0 %v1790
  %1822 = vmatprep.subr.mxu0 0.0
  %1823 = vmatpush1.msra.mxu0 %v1791
  %1824 = vmatprep.subr.mxu0 0.0
  %1825 = vmatpush1.msra.mxu0 %v1792
  %1826 = vmatprep.subr.mxu0 0.0
  %1827 = vmatpush1.msra.mxu0 %v1793
  %1828 = vmatprep.subr.mxu0 0.0
  %1829 = vmatpush1.msra.mxu0 %v1794
  %1830 = vmatprep.subr.mxu0 0.0
  %1831 = vmatpush1.msra.mxu0 %v1795
  %1832 = vmatprep.subr.mxu0 0.0
  %1833 = vmatpush1.msra.mxu0 %v1796
  %1834 = vmatprep.subr.mxu0 0.0
  %1835 = vmatpush1.msra.mxu0 0.0
  %1836 = vmatprep.subr.mxu0 0.0
  %1837 = vmatpush1.msra.mxu0 0.0
  %1838 = vmatprep.subr.mxu0 0.0
  %1839 = vmatpush1.msra.mxu0 0.0
  %1840 = vmatprep.subr.mxu0 0.0
  %1841 = vmatpush1.msra.mxu0 0.0
  %1842 = vmatprep.subr.mxu0 0.0
  %1843 = vmatpush1.msra.mxu0 0.0
  %1844 = vmatprep.subr.mxu0 0.0
  %1845 = vmatpush1.msra.mxu0 0.0
  %1846 = vmatprep.subr.mxu0 0.0
  %1847 = vmatpush1.msra.mxu0 0.0
  %1848 = vmatprep.subr.mxu0 0.0
  %1849 = vmatpush1.msra.mxu0 0.0
  %1850 = vmatprep.subr.mxu0 0.0
  %1851 = vmatpush1.msra.mxu0 0.0
  %1852 = vmatprep.subr.mxu0 0.0
  %1853 = vmatpush1.msra.mxu0 0.0
  %1854 = vmatprep.subr.mxu0 0.0
  %1855 = vmatpush1.msra.mxu0 0.0
  %1856 = vmatprep.subr.mxu0 0.0
  %1857 = vmatpush1.msra.mxu0 0.0
  %1858 = vmatprep.subr.mxu0 0.0
  %1859 = vmatpush1.msra.mxu0 0.0
  %1860 = vmatprep.subr.mxu0 0.0
  %1861 = vmatpush1.msra.mxu0 0.0
  %1862 = vmatprep.subr.mxu0 0.0
  %1863 = vmatpush1.msra.mxu0 0.0
  %1864 = vmatprep.subr.mxu0 0.0
  %1865 = vmatpush1.msra.mxu0 0.0
  %1866 = vmatprep.subr.mxu0 0.0
  %1867 = vmatpush1.msra.mxu0 0.0
  %1868 = vmatprep.subr.mxu0 0.0
  %1869 = vmatpush1.msra.mxu0 0.0
  %1870 = vmatprep.subr.mxu0 0.0
  %1871 = vmatpush1.msra.mxu0 0.0
  %1872 = vmatprep.subr.mxu0 0.0
  %1873 = vmatpush1.msra.mxu0 0.0
  %1874 = vmatprep.subr.mxu0 0.0
  %1875 = vmatpush1.msra.mxu0 0.0
  %1876 = vmatprep.subr.mxu0 0.0
  %1877 = vmatpush1.msra.mxu0 0.0
  %1878 = vmatprep.subr.mxu0 0.0
  %1879 = vmatpush1.msra.mxu0 0.0
  %1880 = vmatprep.subr.mxu0 0.0
  %1881 = vmatpush1.msra.mxu0 0.0
  %1882 = vmatprep.mubr.f32.mxu0 0.0
  %1883 = vmatmul.mubr.f32.gmra.mrb[0].mxu0 %v1807
  %v1884 = vpop.f32.mrb[0].mxu0
  %v1885 = vadd.f32 %v1804, %v1884
  %v1886 = vpop.f32.mrb[0].mxu0
  %1887 = vmatprep.mubr.f32.mxu0 0.0
  %1888 = vmatmul.mubr.f32.gmra.mrb[0].mxu0 %v1810
  %v1889 = vpop.f32.mrb[0].mxu0
  %v1890 = vadd.f32 %v1804, %v1889
  %v1891 = vpop.f32.mrb[0].mxu0
  %1892 = vmatprep.mubr.f32.mxu0 0.0
  %1893 = vmatmul.mubr.f32.gmra.mrb[0].mxu0 %v1813
  %v1894 = vpop.f32.mrb[0].mxu0
  %v1895 = vadd.f32 %v1804, %v1894
  %v1896 = vpop.f32.mrb[0].mxu0
  %1897 = vmatprep.mubr.f32.mxu0 0.0
  %1898 = vmatmul.mubr.f32.gmra.mrb[0].mxu0 %v1816
  %v1899 = vpop.f32.mrb[0].mxu0
  %v1900 = vadd.f32 %v1804, %v1899
  %v1901 = vpop.f32.mrb[0].mxu0
  %1902 = vdwg.mxu0
  %vm1903 = vcmask 31744
  %v1904 = vsel %vm1903, %v1885, 0.0
  %1905 = vadd.xlane.f32.xlu0 %v1904
  %v1906 = vpop.xlane.xlu0 %1905
  %v1907 = vsel %vm1903, %v1890, 0.0
  %1908 = vadd.xlane.f32.xlu0 %v1907
  %v1909 = vpop.xlane.xlu0 %1908
  %v1910 = vsel %vm1903, %v1895, 0.0
  %1911 = vadd.xlane.f32.xlu0 %v1910
  %v1912 = vpop.xlane.xlu0 %1911
  %v1913 = vsel %vm1903, %v1900, 0.0
  %1914 = vadd.xlane.f32.xlu0 %v1913
  %v1915 = vpop.xlane.xlu0 %1914
  %v1916 = vadd.f32 %v1906, %v1909
  %v1917 = vadd.f32 %v1916, %v1912
  %v1918 = vadd.f32 %v1917, %v1915
  %v1919 = vrot.slane %v1918, 4
  %v1920 = vadd.f32 %v1918, %v1919
  %v1921 = vrot.slane %v1920, 2
  %v1922 = vadd.f32 %v1920, %v1921
  %v1923 = vrot.slane %v1922, 1
  %v1924 = vadd.f32 %v1922, %v1923
  %v1925 = vmul.f32 %v1924, %v302
  %v1926 = vsub.f32 %v1885, %v1925
  %v1927 = vsub.f32 %v1890, %v1925
  %v1928 = vsub.f32 %v1895, %v1925
  %v1929 = vsub.f32 %v1900, %v1925
  %v1930 = vmul.f32 %v1926, %v1926
  %v1931 = vmul.f32 %v1927, %v1927
  %v1932 = vmul.f32 %v1928, %v1928
  %v1933 = vmul.f32 %v1929, %v1929
  %v1934 = vsel %vm1903, %v1930, 0.0
  %1935 = vadd.xlane.f32.xlu0 %v1934
  %v1936 = vpop.xlane.xlu0 %1935
  %v1937 = vsel %vm1903, %v1931, 0.0
  %1938 = vadd.xlane.f32.xlu0 %v1937
  %v1939 = vpop.xlane.xlu0 %1938
  %v1940 = vsel %vm1903, %v1932, 0.0
  %1941 = vadd.xlane.f32.xlu0 %v1940
  %v1942 = vpop.xlane.xlu0 %1941
  %v1943 = vsel %vm1903, %v1933, 0.0
  %1944 = vadd.xlane.f32.xlu0 %v1943
  %v1945 = vpop.xlane.xlu0 %1944
  %v1946 = vadd.f32 %v1936, %v1939
  %v1947 = vadd.f32 %v1946, %v1942
  %v1948 = vadd.f32 %v1947, %v1945
  %v1949 = vrot.slane %v1948, 4
  %v1950 = vadd.f32 %v1948, %v1949
  %v1951 = vrot.slane %v1950, 2
  %v1952 = vadd.f32 %v1950, %v1951
  %v1953 = vrot.slane %v1952, 1
  %v1954 = vadd.f32 %v1952, %v1953
  %v1955 = vmul.f32 %v1954, %v302
  %v1956 = vadd.f32 %v1955, 1e-05
  %v1957 = vrsqrt.pop %v1956
  %v1958 = vmul.f32 %v1926, %v1957
  %v1959 = vmul.f32 %v1927, %v1957
  %v1960 = vmul.f32 %v1928, %v1957
  %v1961 = vmul.f32 %v1929, %v1957
  %1962 = vset.pattern.permute.xlu0 1
  %1963 = vperm.xlu0 %1962, %v1801
  %v1964 = vpop.permute.xlu0 %1963
  %v1966 = vmul.f32 %v1958, %v1964
  %v1967 = vmul.f32 %v1959, %v1964
  %v1968 = vmul.f32 %v1960, %v1964
  %v1969 = vmul.f32 %v1961, %v1964
  %1970 = vset.pattern.permute.xlu0 2
  %1971 = vperm.xlu0 %1970, %v1801
  %v1972 = vpop.permute.xlu0 %1971
  %v1974 = vadd.f32 %v1966, %v1972
  %v1975 = vadd.f32 %v1967, %v1972
  %v1976 = vadd.f32 %v1968, %v1972
  %v1977 = vadd.f32 %v1969, %v1972
  %v1978 = vmax.f32 %v1974, 0.0
  %v1979 = vmax.f32 %v1975, 0.0
  %v1980 = vmax.f32 %v1976, 0.0
  %v1981 = vmax.f32 %v1977, 0.0
  %1982 = vst.msk [vmem:[%s12] sm:$0xff] %vm1903, %v1978
  %1983 = vst.msk [vmem:[%s12 + $0x8] sm:$0xff] %vm1903, %v1979
  %1984 = vst.msk [vmem:[%s12 + $0x10] sm:$0xff] %vm1903, %v1980
  %1985 = vst.msk [vmem:[%s12 + $0x18] sm:$0xff] %vm1903, %v1981
  // Predicated region
  $region50: #{edge_reconstruct.1} parent=0 // pred_check
    _
  $region51: #{edge_reconstruct.1} parent=0 // pred_check_branch
    %1987 = sbr.rel (0) target = $region53
  $region52: #{edge_reconstruct.1} parent=0 // pred_region
    _
  $region53: #{edge_reconstruct.1} parent=0 // pred_fallthru
    _
  // Predicated region
  $region54: #{edge_reconstruct.1} parent=0 // pred_check
    _
  $region55: #{edge_reconstruct.1} parent=0 // pred_check_branch
    %1989 = sbr.rel (0) target = $region57
  $region56: #{edge_reconstruct.1} parent=0 // pred_region
    _
  $region57: #{edge_reconstruct.1} parent=0 // pred_fallthru
    _

</llo_original>
